<compile_context>
chip_gen: v6e
topology: v6e:2x2x1
jax: 0.10.0
libtpu: 0.0.40
codegen_flags: <defaults>
</compile_context>

<pallas_src>
import functools

import jax
import jax.numpy as jnp
from jax.experimental import pallas as pl
from jax.experimental.pallas import tpu as pltpu

EPS = 1e-5  # nn.BatchNorm2d default


# ---------------------------------------------------------------------------
# In-kernel helpers
# ---------------------------------------------------------------------------
def _row_shifted_slabs(x2d, n_img, h_img):
    """Return (up, mid, dn) ky-shifted copies of a lane-dense (N*H, L) slab.

    up[r]  = x[r-1] within the same image, 0 at h == 0       (ky = 0)
    mid[r] = x[r]                                            (ky = 1)
    dn[r]  = x[r+1] within the same image, 0 at h == H-1     (ky = 2)

    Built with per-image static slices + zero rows, so there is no cross-image
    bleed, no iota/mask arithmetic, and no scratch traffic (a few vregs only).
    """
    lanes = x2d.shape[1]
    zrow = jnp.zeros((1, lanes), x2d.dtype)
    up_parts, dn_parts = [], []
    for n in range(n_img):
        r0 = n * h_img
        up_parts.append(zrow)
        up_parts.append(x2d[r0:r0 + h_img - 1, :])
        dn_parts.append(x2d[r0 + 1:r0 + h_img, :])
        dn_parts.append(zrow)
    up = jnp.concatenate(up_parts, axis=0)
    dn = jnp.concatenate(dn_parts, axis=0)
    return up, x2d, dn


def _conv3x3_banded(slabs, wb_ref, k_rows):
    """3x3 'same' conv as 3 banded matmuls on lane-dense (N*H, W*Ci) slabs.

    slabs:  (up, mid, dn) bf16 values, each (N*H, W*Ci)
    wb_ref: (3*W*Ci, W*Co) bf16 ref; rows [ky*W*Ci, (ky+1)*W*Ci) hold the
            block-banded weight for vertical tap ky.
    returns (N*H, W*Co) float32 accumulator.
    """
    acc = None
    for ky, slab in enumerate(slabs):
        wk = wb_ref[ky * k_rows:(ky + 1) * k_rows, :]
        part = jnp.dot(slab, wk, preferred_element_type=jnp.float32)
        acc = part if acc is None else acc + part
    return acc


def _bn_relu_lane_dense(acc, gamma, beta_tiled, red, bcast, inv_m):
    """Training-mode BatchNorm2d + ReLU on a lane-dense (N*H, W*C) f32 slab.

    gamma:      (1, C)      red:   (W*C, C)  0/1 channel-reduce matrix
    beta_tiled: (1, W*C)    bcast: (C, W*C)  0/1 channel-broadcast matrix
    Two-pass variance: var = mean((x - mean)^2), biased (matches PyTorch
    training-mode normalization).
    """
    rowsum = jnp.sum(acc, axis=0, keepdims=True)                         # (1, W*C)
    mean_c = jnp.dot(rowsum, red, preferred_element_type=jnp.float32) * inv_m
    mean_t = jnp.dot(mean_c, bcast, preferred_element_type=jnp.float32)  # (1, W*C)
    centered = acc - mean_t
    sqsum = jnp.sum(centered * centered, axis=0, keepdims=True)
    var_c = jnp.dot(sqsum, red, preferred_element_type=jnp.float32) * inv_m
    scale_c = gamma * jax.lax.rsqrt(var_c + EPS)                         # (1, C)
    scale_t = jnp.dot(scale_c, bcast, preferred_element_type=jnp.float32)
    return jnp.maximum(centered * scale_t + beta_tiled, 0.0)


def _double_conv_kernel(x_ref, wb1_ref, wb2_ref, g1_ref, b1t_ref, g2_ref,
                        b2t_ref, red1_ref, bc1_ref, red2_ref, bc2_ref, o_ref,
                        *, n_img, h_img, w_img, c_in, c_mid):
    inv_m = 1.0 / float(n_img * h_img * w_img)

    # conv1 -> BN1 -> ReLU  (everything stays in vregs; no scratch)
    x2d = x_ref[...]                                         # (N*H, W*Cin) bf16
    slabs1 = _row_shifted_slabs(x2d, n_img, h_img)
    acc1 = _conv3x3_banded(slabs1, wb1_ref, w_img * c_in)    # (N*H, W*Cmid) f32
    y1 = _bn_relu_lane_dense(acc1, g1_ref[...], b1t_ref[...],
                             red1_ref[...], bc1_ref[...], inv_m)

    # conv2 -> BN2 -> ReLU
    y1_bf = y1.astype(jnp.bfloat16)
    slabs2 = _row_shifted_slabs(y1_bf, n_img, h_img)
    acc2 = _conv3x3_banded(slabs2, wb2_ref, w_img * c_mid)   # (N*H, W*Cout) f32
    y2 = _bn_relu_lane_dense(acc2, g2_ref[...], b2t_ref[...],
                             red2_ref[...], bc2_ref[...], inv_m)

    # Lane-dense output slab: (N*H, W*Cout) -> unmasked full-lane stores.
    o_ref[...] = y2.astype(o_ref.dtype)


# ---------------------------------------------------------------------------
# Wrapper-side weight / constant preparation (trace-time, tiny)
# ---------------------------------------------------------------------------
def _banded_conv_weights(w_oihw, w_img):
    """OIHW 3x3 weights -> row-stacked banded matrices (3*W*Ci, W*Co), bf16.

    For vertical tap ky, band[u*Ci+ci, w*Co+co] = W[ky, u-w+1, ci, co] when
    |u - w| <= 1 (else 0), so that  (ky-shifted slab) @ band  performs the
    horizontal (kx) and channel (ci) contraction with 'same' zero padding.
    """
    c_out, c_in = w_oihw.shape[0], w_oihw.shape[1]
    w_hwio = jnp.transpose(w_oihw, (2, 3, 1, 0)).astype(jnp.float32)  # (ky,kx,Ci,Co)
    per_ky = []
    for ky in range(3):
        band = jnp.zeros((w_img * c_in, w_img * c_out), jnp.float32)
        for kx in range(3):
            band = band + jnp.kron(
                jnp.eye(w_img, k=1 - kx, dtype=jnp.float32), w_hwio[ky, kx])
        per_ky.append(band)
    return jnp.concatenate(per_ky, axis=0).astype(jnp.bfloat16)


def _channel_mats(c, w_img):
    """0/1 matrices mapping lane-dense (w, c) columns <-> per-channel c."""
    eye = jnp.eye(c, dtype=jnp.float32)
    red = jnp.tile(eye, (w_img, 1))      # (W*C, C)   sum over w-groups
    bcast = jnp.tile(eye, (1, w_img))    # (C, W*C)   tile back across w
    return red, bcast


def double_conv_pallas(x_nchw, w1_oihw, g1, b1, w2_oihw, g2, b2):
    """Forward pass of DoubleConv. x_nchw: (N, Cin, H, W) float32."""
    N, Cin, H, W = x_nchw.shape
    Cmid = w1_oihw.shape[0]
    Cout = w2_oihw.shape[0]

    # NCHW -> lane-dense (N*H, W*Cin), carried into the kernel in bf16
    # (MXU operands are bf16 anyway; halves the HBM->VMEM DMA of x).
    x2d = jnp.transpose(x_nchw, (0, 2, 3, 1)).reshape(N * H, W * Cin)
    x2d = x2d.astype(jnp.bfloat16)

    wb1 = _banded_conv_weights(w1_oihw, W)    # (3*W*Cin,  W*Cmid) bf16
    wb2 = _banded_conv_weights(w2_oihw, W)    # (3*W*Cmid, W*Cout) bf16
    red1, bc1 = _channel_mats(Cmid, W)
    red2, bc2 = _channel_mats(Cout, W)
    b1t = jnp.tile(b1.reshape(1, Cmid).astype(jnp.float32), (1, W))  # (1, W*Cmid)
    b2t = jnp.tile(b2.reshape(1, Cout).astype(jnp.float32), (1, W))  # (1, W*Cout)

    kernel = functools.partial(
        _double_conv_kernel,
        n_img=N, h_img=H, w_img=W, c_in=Cin, c_mid=Cmid)

    out2d = pl.pallas_call(
        kernel,
        out_shape=jax.ShapeDtypeStruct((N * H, W * Cout), jnp.float32),
        in_specs=[pl.BlockSpec(memory_space=pltpu.MemorySpace.VMEM)] * 11,
        out_specs=pl.BlockSpec(memory_space=pltpu.MemorySpace.VMEM),
        # Tiny footprint here (<1 MiB); 32 MiB is safe on every generation
        # (fits v7x's 64 MiB physical VMEM with headroom, and is an explicit
        # raise over v5e's 16 MiB default scoped limit).  Re-derive per band
        # once the halo-tiled grid (TODO above) exists.
        compiler_params=pltpu.CompilerParams(
            vmem_limit_bytes=32 * 1024 * 1024),
    )(x2d, wb1, wb2,
      g1.reshape(1, Cmid).astype(jnp.float32), b1t,
      g2.reshape(1, Cout).astype(jnp.float32), b2t,
      red1, bc1, red2, bc2)

    # (N*H, W*Cout) lane-dense slab -> NHWC -> NCHW (test interface only).
    return jnp.transpose(out2d.reshape(N, H, W, Cout), (0, 3, 1, 2))


# ---------------------------------------------------------------------------
# Pure-JAX reference (PyTorch training-mode forward semantics)
# ---------------------------------------------------------------------------
def _reference_double_conv(x_nchw, w1_oihw, g1, b1, w2_oihw, g2, b2):
    def conv(x, w):
        return jax.lax.conv_general_dilated(
            x, w, window_strides=(1, 1), padding=((1, 1), (1, 1)),
            dimension_numbers=("NCHW", "OIHW", "NCHW"))

    def bn_relu(y, g, b):
        mean = jnp.mean(y, axis=(0, 2, 3), keepdims=True)
        var = jnp.mean((y - mean) ** 2, axis=(0, 2, 3), keepdims=True)
        yn = (y - mean) * jax.lax.rsqrt(var + EPS)
        return jnp.maximum(
            yn * g.reshape(1, -1, 1, 1) + b.reshape(1, -1, 1, 1), 0.0)

    y = bn_relu(conv(x_nchw, w1_oihw), g1, b1)
    return bn_relu(conv(y, w2_oihw), g2, b2)


if __name__ == "__main__":
    # DoubleConv(in_channels=4, out_channels=8) -> mid_channels = 8
    N, Cin, H, W = 2, 4, 16, 16
    Cmid, Cout = 8, 8

    key = jax.random.PRNGKey(0)
    k_x, k_w1, k_w2, k_g1, k_b1, k_g2, k_b2 = jax.random.split(key, 7)

    x = jax.random.normal(k_x, (N, Cin, H, W), jnp.float32)
    # Conv2d weights (no bias), PyTorch OIHW shapes.
    w1 = jax.random.normal(k_w1, (Cmid, Cin, 3, 3), jnp.float32) * 0.1
    w2 = jax.random.normal(k_w2, (Cout, Cmid, 3, 3), jnp.float32) * 0.1
    # BatchNorm affine params (random to exercise the affine path).
    g1 = 1.0 + 0.1 * jax.random.normal(k_g1, (Cmid,), jnp.float32)
    b1 = 0.1 * jax.random.normal(k_b1, (Cmid,), jnp.float32)
    g2 = 1.0 + 0.1 * jax.random.normal(k_g2, (Cout,), jnp.float32)
    b2 = 0.1 * jax.random.normal(k_b2, (Cout,), jnp.float32)

    out = jax.jit(double_conv_pallas)(x, w1, g1, b1, w2, g2, b2)
    out = jax.block_until_ready(out)

    ref = _reference_double_conv(x, w1, g1, b1, w2, g2, b2)
    assert out.shape == (N, Cout, H, W), out.shape
    # bf16 matmul operands (f32 accumulation/BN) -> slightly relaxed tolerance.
    max_err = float(jnp.max(jnp.abs(out - ref)))
    assert jnp.allclose(out, ref, atol=5e-2, rtol=5e-2), max_err

    print("KERNEL_OK")
</pallas_src>

<mosaic_0001>
module attributes {stable_mosaic.version = 11 : i64} {
  func.func @_double_conv_kernel(%arg0: memref<32x64xbf16, #tpu.memory_space<vmem>>, %arg1: memref<192x128xbf16, #tpu.memory_space<vmem>>, %arg2: memref<384x128xbf16, #tpu.memory_space<vmem>>, %arg3: memref<1x8xf32, #tpu.memory_space<vmem>>, %arg4: memref<1x128xf32, #tpu.memory_space<vmem>>, %arg5: memref<1x8xf32, #tpu.memory_space<vmem>>, %arg6: memref<1x128xf32, #tpu.memory_space<vmem>>, %arg7: memref<128x8xf32, #tpu.memory_space<vmem>>, %arg8: memref<8x128xf32, #tpu.memory_space<vmem>>, %arg9: memref<128x8xf32, #tpu.memory_space<vmem>>, %arg10: memref<8x128xf32, #tpu.memory_space<vmem>>, %arg11: memref<32x128xf32, #tpu.memory_space<vmem>>) attributes {dimension_semantics = [], scalar_prefetch = 0 : i64, scratch_operands = 0 : i64, tpu.core_type = #tpu.core_type<tc>} {
    %c0 = arith.constant 0 : index
    %c0_0 = arith.constant 0 : index
    %0 = vector.load %arg0[%c0, %c0_0] : memref<32x64xbf16, #tpu.memory_space<vmem>>, vector<32x64xbf16>
    %cst = arith.constant 0.000000e+00 : bf16
    %1 = vector.broadcast %cst : bf16 to vector<1x64xbf16>
    %2 = vector.extract_strided_slice %0 {offsets = [0, 0], sizes = [15, 64], strides = [1, 1]} : vector<32x64xbf16> to vector<15x64xbf16>
    %3 = vector.extract_strided_slice %0 {offsets = [1, 0], sizes = [15, 64], strides = [1, 1]} : vector<32x64xbf16> to vector<15x64xbf16>
    %4 = vector.extract_strided_slice %0 {offsets = [16, 0], sizes = [15, 64], strides = [1, 1]} : vector<32x64xbf16> to vector<15x64xbf16>
    %5 = vector.extract_strided_slice %0 {offsets = [17, 0], sizes = [15, 64], strides = [1, 1]} : vector<32x64xbf16> to vector<15x64xbf16>
    %6 = tpu.concatenate %1, %2, %1, %4 in 0 : vector<1x64xbf16>, vector<15x64xbf16>, vector<1x64xbf16>, vector<15x64xbf16> -> vector<32x64xbf16>
    %7 = tpu.concatenate %3, %1, %5, %1 in 0 : vector<15x64xbf16>, vector<1x64xbf16>, vector<15x64xbf16>, vector<1x64xbf16> -> vector<32x64xbf16>
    %c0_1 = arith.constant 0 : index
    %c0_2 = arith.constant 0 : index
    %8 = vector.load %arg1[%c0_1, %c0_2] : memref<192x128xbf16, #tpu.memory_space<vmem>>, vector<64x128xbf16>
    %cst_3 = arith.constant dense<0.000000e+00> : vector<32x128xf32>
    %9 = tpu.matmul %6, %8, %cst_3 {dimension_numbers = #tpu.dot_dimension_numbers<[1], [0], [0], [1], [0, 0, 1, 1], [], []>} : vector<32x64xbf16>, vector<64x128xbf16>, vector<32x128xf32> -> vector<32x128xf32>
    %c64 = arith.constant 64 : index
    %c0_4 = arith.constant 0 : index
    %10 = vector.load %arg1[%c64, %c0_4] : memref<192x128xbf16, #tpu.memory_space<vmem>>, vector<64x128xbf16>
    %cst_5 = arith.constant dense<0.000000e+00> : vector<32x128xf32>
    %11 = tpu.matmul %0, %10, %cst_5 {dimension_numbers = #tpu.dot_dimension_numbers<[1], [0], [0], [1], [0, 0, 1, 1], [], []>} : vector<32x64xbf16>, vector<64x128xbf16>, vector<32x128xf32> -> vector<32x128xf32>
    %12 = arith.addf %9, %11 : vector<32x128xf32>
    %c128 = arith.constant 128 : index
    %c0_6 = arith.constant 0 : index
    %13 = vector.load %arg1[%c128, %c0_6] : memref<192x128xbf16, #tpu.memory_space<vmem>>, vector<64x128xbf16>
    %cst_7 = arith.constant dense<0.000000e+00> : vector<32x128xf32>
    %14 = tpu.matmul %7, %13, %cst_7 {dimension_numbers = #tpu.dot_dimension_numbers<[1], [0], [0], [1], [0, 0, 1, 1], [], []>} : vector<32x64xbf16>, vector<64x128xbf16>, vector<32x128xf32> -> vector<32x128xf32>
    %15 = arith.addf %12, %14 : vector<32x128xf32>
    %c0_8 = arith.constant 0 : index
    %c0_9 = arith.constant 0 : index
    %16 = vector.load %arg3[%c0_8, %c0_9] : memref<1x8xf32, #tpu.memory_space<vmem>>, vector<1x8xf32>
    %c0_10 = arith.constant 0 : index
    %c0_11 = arith.constant 0 : index
    %17 = vector.load %arg4[%c0_10, %c0_11] : memref<1x128xf32, #tpu.memory_space<vmem>>, vector<1x128xf32>
    %c0_12 = arith.constant 0 : index
    %c0_13 = arith.constant 0 : index
    %18 = vector.load %arg7[%c0_12, %c0_13] : memref<128x8xf32, #tpu.memory_space<vmem>>, vector<128x8xf32>
    %c0_14 = arith.constant 0 : index
    %c0_15 = arith.constant 0 : index
    %19 = vector.load %arg8[%c0_14, %c0_15] : memref<8x128xf32, #tpu.memory_space<vmem>>, vector<8x128xf32>
    %cst_16 = arith.constant dense<0.000000e+00> : vector<128xf32>
    %20 = vector.multi_reduction <add>, %15, %cst_16 [0] : vector<32x128xf32> to vector<128xf32>
    %21 = vector.shape_cast %20 : vector<128xf32> to vector<1x128xf32>
    %cst_17 = arith.constant dense<0.000000e+00> : vector<1x8xf32>
    %22 = tpu.matmul %21, %18, %cst_17 {dimension_numbers = #tpu.dot_dimension_numbers<[1], [0], [0], [1], [0, 0, 1, 1], [], []>} : vector<1x128xf32>, vector<128x8xf32>, vector<1x8xf32> -> vector<1x8xf32>
    %cst_18 = arith.constant 0.001953125 : f32
    %23 = vector.broadcast %cst_18 : f32 to vector<1x8xf32>
    %24 = arith.mulf %22, %23 : vector<1x8xf32>
    %cst_19 = arith.constant dense<0.000000e+00> : vector<1x128xf32>
    %25 = tpu.matmul %24, %19, %cst_19 {dimension_numbers = #tpu.dot_dimension_numbers<[1], [0], [0], [1], [0, 0, 1, 1], [], []>} : vector<1x8xf32>, vector<8x128xf32>, vector<1x128xf32> -> vector<1x128xf32>
    %26 = vector.broadcast %25 : vector<1x128xf32> to vector<32x128xf32>
    %27 = arith.subf %15, %26 : vector<32x128xf32>
    %28 = arith.mulf %27, %27 : vector<32x128xf32>
    %cst_20 = arith.constant dense<0.000000e+00> : vector<128xf32>
    %29 = vector.multi_reduction <add>, %28, %cst_20 [0] : vector<32x128xf32> to vector<128xf32>
    %30 = vector.shape_cast %29 : vector<128xf32> to vector<1x128xf32>
    %cst_21 = arith.constant dense<0.000000e+00> : vector<1x8xf32>
    %31 = tpu.matmul %30, %18, %cst_21 {dimension_numbers = #tpu.dot_dimension_numbers<[1], [0], [0], [1], [0, 0, 1, 1], [], []>} : vector<1x128xf32>, vector<128x8xf32>, vector<1x8xf32> -> vector<1x8xf32>
    %cst_22 = arith.constant 0.001953125 : f32
    %32 = vector.broadcast %cst_22 : f32 to vector<1x8xf32>
    %33 = arith.mulf %31, %32 : vector<1x8xf32>
    %cst_23 = arith.constant 9.99999974E-6 : f32
    %34 = vector.broadcast %cst_23 : f32 to vector<1x8xf32>
    %35 = arith.addf %33, %34 : vector<1x8xf32>
    %36 = math.rsqrt %35 : vector<1x8xf32>
    %37 = arith.mulf %16, %36 : vector<1x8xf32>
    %cst_24 = arith.constant dense<0.000000e+00> : vector<1x128xf32>
    %38 = tpu.matmul %37, %19, %cst_24 {dimension_numbers = #tpu.dot_dimension_numbers<[1], [0], [0], [1], [0, 0, 1, 1], [], []>} : vector<1x8xf32>, vector<8x128xf32>, vector<1x128xf32> -> vector<1x128xf32>
    %39 = vector.broadcast %38 : vector<1x128xf32> to vector<32x128xf32>
    %40 = arith.mulf %27, %39 : vector<32x128xf32>
    %41 = vector.broadcast %17 : vector<1x128xf32> to vector<32x128xf32>
    %42 = arith.addf %40, %41 : vector<32x128xf32>
    %cst_25 = arith.constant 0.000000e+00 : f32
    %43 = vector.broadcast %cst_25 : f32 to vector<32x128xf32>
    %44 = arith.maximumf %42, %43 : vector<32x128xf32>
    %45 = arith.truncf %44 : vector<32x128xf32> to vector<32x128xbf16>
    %cst_26 = arith.constant 0.000000e+00 : bf16
    %46 = vector.broadcast %cst_26 : bf16 to vector<1x128xbf16>
    %47 = vector.extract_strided_slice %45 {offsets = [0, 0], sizes = [15, 128], strides = [1, 1]} : vector<32x128xbf16> to vector<15x128xbf16>
    %48 = vector.extract_strided_slice %45 {offsets = [1, 0], sizes = [15, 128], strides = [1, 1]} : vector<32x128xbf16> to vector<15x128xbf16>
    %49 = vector.extract_strided_slice %45 {offsets = [16, 0], sizes = [15, 128], strides = [1, 1]} : vector<32x128xbf16> to vector<15x128xbf16>
    %50 = vector.extract_strided_slice %45 {offsets = [17, 0], sizes = [15, 128], strides = [1, 1]} : vector<32x128xbf16> to vector<15x128xbf16>
    %51 = tpu.concatenate %46, %47, %46, %49 in 0 : vector<1x128xbf16>, vector<15x128xbf16>, vector<1x128xbf16>, vector<15x128xbf16> -> vector<32x128xbf16>
    %52 = tpu.concatenate %48, %46, %50, %46 in 0 : vector<15x128xbf16>, vector<1x128xbf16>, vector<15x128xbf16>, vector<1x128xbf16> -> vector<32x128xbf16>
    %c0_27 = arith.constant 0 : index
    %c0_28 = arith.constant 0 : index
    %53 = vector.load %arg2[%c0_27, %c0_28] : memref<384x128xbf16, #tpu.memory_space<vmem>>, vector<128x128xbf16>
    %cst_29 = arith.constant dense<0.000000e+00> : vector<32x128xf32>
    %54 = tpu.matmul %51, %53, %cst_29 {dimension_numbers = #tpu.dot_dimension_numbers<[1], [0], [0], [1], [0, 0, 1, 1], [], []>} : vector<32x128xbf16>, vector<128x128xbf16>, vector<32x128xf32> -> vector<32x128xf32>
    %c128_30 = arith.constant 128 : index
    %c0_31 = arith.constant 0 : index
    %55 = vector.load %arg2[%c128_30, %c0_31] : memref<384x128xbf16, #tpu.memory_space<vmem>>, vector<128x128xbf16>
    %cst_32 = arith.constant dense<0.000000e+00> : vector<32x128xf32>
    %56 = tpu.matmul %45, %55, %cst_32 {dimension_numbers = #tpu.dot_dimension_numbers<[1], [0], [0], [1], [0, 0, 1, 1], [], []>} : vector<32x128xbf16>, vector<128x128xbf16>, vector<32x128xf32> -> vector<32x128xf32>
    %57 = arith.addf %54, %56 : vector<32x128xf32>
    %c256 = arith.constant 256 : index
    %c0_33 = arith.constant 0 : index
    %58 = vector.load %arg2[%c256, %c0_33] : memref<384x128xbf16, #tpu.memory_space<vmem>>, vector<128x128xbf16>
    %cst_34 = arith.constant dense<0.000000e+00> : vector<32x128xf32>
    %59 = tpu.matmul %52, %58, %cst_34 {dimension_numbers = #tpu.dot_dimension_numbers<[1], [0], [0], [1], [0, 0, 1, 1], [], []>} : vector<32x128xbf16>, vector<128x128xbf16>, vector<32x128xf32> -> vector<32x128xf32>
    %60 = arith.addf %57, %59 : vector<32x128xf32>
    %c0_35 = arith.constant 0 : index
    %c0_36 = arith.constant 0 : index
    %61 = vector.load %arg5[%c0_35, %c0_36] : memref<1x8xf32, #tpu.memory_space<vmem>>, vector<1x8xf32>
    %c0_37 = arith.constant 0 : index
    %c0_38 = arith.constant 0 : index
    %62 = vector.load %arg6[%c0_37, %c0_38] : memref<1x128xf32, #tpu.memory_space<vmem>>, vector<1x128xf32>
    %c0_39 = arith.constant 0 : index
    %c0_40 = arith.constant 0 : index
    %63 = vector.load %arg9[%c0_39, %c0_40] : memref<128x8xf32, #tpu.memory_space<vmem>>, vector<128x8xf32>
    %c0_41 = arith.constant 0 : index
    %c0_42 = arith.constant 0 : index
    %64 = vector.load %arg10[%c0_41, %c0_42] : memref<8x128xf32, #tpu.memory_space<vmem>>, vector<8x128xf32>
    %cst_43 = arith.constant dense<0.000000e+00> : vector<128xf32>
    %65 = vector.multi_reduction <add>, %60, %cst_43 [0] : vector<32x128xf32> to vector<128xf32>
    %66 = vector.shape_cast %65 : vector<128xf32> to vector<1x128xf32>
    %cst_44 = arith.constant dense<0.000000e+00> : vector<1x8xf32>
    %67 = tpu.matmul %66, %63, %cst_44 {dimension_numbers = #tpu.dot_dimension_numbers<[1], [0], [0], [1], [0, 0, 1, 1], [], []>} : vector<1x128xf32>, vector<128x8xf32>, vector<1x8xf32> -> vector<1x8xf32>
    %cst_45 = arith.constant 0.001953125 : f32
    %68 = vector.broadcast %cst_45 : f32 to vector<1x8xf32>
    %69 = arith.mulf %67, %68 : vector<1x8xf32>
    %cst_46 = arith.constant dense<0.000000e+00> : vector<1x128xf32>
    %70 = tpu.matmul %69, %64, %cst_46 {dimension_numbers = #tpu.dot_dimension_numbers<[1], [0], [0], [1], [0, 0, 1, 1], [], []>} : vector<1x8xf32>, vector<8x128xf32>, vector<1x128xf32> -> vector<1x128xf32>
    %71 = vector.broadcast %70 : vector<1x128xf32> to vector<32x128xf32>
    %72 = arith.subf %60, %71 : vector<32x128xf32>
    %73 = arith.mulf %72, %72 : vector<32x128xf32>
    %cst_47 = arith.constant dense<0.000000e+00> : vector<128xf32>
    %74 = vector.multi_reduction <add>, %73, %cst_47 [0] : vector<32x128xf32> to vector<128xf32>
    %75 = vector.shape_cast %74 : vector<128xf32> to vector<1x128xf32>
    %cst_48 = arith.constant dense<0.000000e+00> : vector<1x8xf32>
    %76 = tpu.matmul %75, %63, %cst_48 {dimension_numbers = #tpu.dot_dimension_numbers<[1], [0], [0], [1], [0, 0, 1, 1], [], []>} : vector<1x128xf32>, vector<128x8xf32>, vector<1x8xf32> -> vector<1x8xf32>
    %cst_49 = arith.constant 0.001953125 : f32
    %77 = vector.broadcast %cst_49 : f32 to vector<1x8xf32>
    %78 = arith.mulf %76, %77 : vector<1x8xf32>
    %cst_50 = arith.constant 9.99999974E-6 : f32
    %79 = vector.broadcast %cst_50 : f32 to vector<1x8xf32>
    %80 = arith.addf %78, %79 : vector<1x8xf32>
    %81 = math.rsqrt %80 : vector<1x8xf32>
    %82 = arith.mulf %61, %81 : vector<1x8xf32>
    %cst_51 = arith.constant dense<0.000000e+00> : vector<1x128xf32>
    %83 = tpu.matmul %82, %64, %cst_51 {dimension_numbers = #tpu.dot_dimension_numbers<[1], [0], [0], [1], [0, 0, 1, 1], [], []>} : vector<1x8xf32>, vector<8x128xf32>, vector<1x128xf32> -> vector<1x128xf32>
    %84 = vector.broadcast %83 : vector<1x128xf32> to vector<32x128xf32>
    %85 = arith.mulf %72, %84 : vector<32x128xf32>
    %86 = vector.broadcast %62 : vector<1x128xf32> to vector<32x128xf32>
    %87 = arith.addf %85, %86 : vector<32x128xf32>
    %cst_52 = arith.constant 0.000000e+00 : f32
    %88 = vector.broadcast %cst_52 : f32 to vector<32x128xf32>
    %89 = arith.maximumf %87, %88 : vector<32x128xf32>
    %c0_53 = arith.constant 0 : index
    %c0_54 = arith.constant 0 : index
    %90 = vector.load %arg11[%c0_53, %c0_54] : memref<32x128xf32, #tpu.memory_space<vmem>>, vector<32x128xf32>
    tpu.vector_store %arg11[%c0_53, %c0_54], %89 {strides = array<i32>} : memref<32x128xf32, #tpu.memory_space<vmem>>, vector<32x128xf32>,
    return
  }
}

</mosaic_0001>

<llo_original>
// kernel: tile.37
$region0: #{tile.37}
  %s0 = inlined_call_operand.vmem [shape: f32[8,16,8], index: 0, kind: input, shape index: {}]
  %s1 = inlined_call_operand.vmem [shape: f32[8,128], index: 1, kind: output, shape index: {}]
  %s2 = smov 3
  %v3 = vld [vmem:[%s0] ss:$16 sm:%s2]
  %s4 = smov 12
  %v5 = vld [vmem:[%s0] ss:$16 sm:%s4]
  %vm6 = vcmask 1043458
  %v7 = vsel %vm6, %v5, %v3
  %s8 = smov 48
  %v9 = vld [vmem:[%s0] ss:$16 sm:%s8]
  %vm10 = vcmask 1045508
  %v11 = vsel %vm10, %v9, %v7
  %s12 = smov 192
  %v13 = vld [vmem:[%s0] ss:$16 sm:%s12]
  %vm14 = vcmask 1047558
  %v15 = vsel %vm14, %v13, %v11
  %vm16 = vcmask 64512
  %17 = vst.msk [vmem:[%s1] sm:$0xff] %vm16, %v15
  %s18 = scalar_lea.vmem %s0, 15
  %s19 = smov 3
  %v20 = vld [vmem:[%s18] ss:$16 sm:%s19]
  %s21 = scalar_lea.vmem %s0, 15
  %s22 = smov 12
  %v23 = vld [vmem:[%s21] ss:$16 sm:%s22]
  %vm24 = vcmask 1043458
  %v25 = vsel %vm24, %v23, %v20
  %s26 = scalar_lea.vmem %s0, 15
  %s27 = smov 48
  %v28 = vld [vmem:[%s26] ss:$16 sm:%s27]
  %vm29 = vcmask 1045508
  %v30 = vsel %vm29, %v28, %v25
  %s31 = scalar_lea.vmem %s0, 15
  %s32 = smov 192
  %v33 = vld [vmem:[%s31] ss:$16 sm:%s32]
  %vm34 = vcmask 1047558
  %v35 = vsel %vm34, %v33, %v30
  %36 = vrot.lane.b32.xlu0 %v35, 120
  %v37 = vpop.permute.xlu0 %36
  %vm38 = vcmask 1048512
  %39 = vst.msk [vmem:[%s1] sm:$0xff] %vm38, %v37
  %s40 = scalar_lea.vmem %s0, 14
  %s41 = smov 3
  %v42 = vld [vmem:[%s40] ss:$16 sm:%s41]
  %s43 = scalar_lea.vmem %s0, 14
  %s44 = smov 12
  %v45 = vld [vmem:[%s43] ss:$16 sm:%s44]
  %vm46 = vcmask 1043458
  %v47 = vsel %vm46, %v45, %v42
  %s48 = scalar_lea.vmem %s0, 14
  %s49 = smov 48
  %v50 = vld [vmem:[%s48] ss:$16 sm:%s49]
  %vm51 = vcmask 1045508
  %v52 = vsel %vm51, %v50, %v47
  %s53 = scalar_lea.vmem %s0, 14
  %s54 = smov 192
  %v55 = vld [vmem:[%s53] ss:$16 sm:%s54]
  %vm56 = vcmask 1047558
  %v57 = vsel %vm56, %v55, %v52
  %58 = vrot.lane.b32.xlu0 %v57, 112
  %v59 = vpop.permute.xlu0 %58
  %vm60 = vcmask 982912
  %61 = vst.msk [vmem:[%s1] sm:$0xff] %vm60, %v59
  %s62 = scalar_lea.vmem %s0, 13
  %s63 = smov 3
  %v64 = vld [vmem:[%s62] ss:$16 sm:%s63]
  %s65 = scalar_lea.vmem %s0, 13
  %s66 = smov 12
  %v67 = vld [vmem:[%s65] ss:$16 sm:%s66]
  %vm68 = vcmask 1043458
  %v69 = vsel %vm68, %v67, %v64
  %s70 = scalar_lea.vmem %s0, 13
  %s71 = smov 48
  %v72 = vld [vmem:[%s70] ss:$16 sm:%s71]
  %vm73 = vcmask 1045508
  %v74 = vsel %vm73, %v72, %v69
  %s75 = scalar_lea.vmem %s0, 13
  %s76 = smov 192
  %v77 = vld [vmem:[%s75] ss:$16 sm:%s76]
  %vm78 = vcmask 1047558
  %v79 = vsel %vm78, %v77, %v74
  %80 = vrot.lane.b32.xlu0 %v79, 104
  %v81 = vpop.permute.xlu0 %80
  %vm82 = vcmask 917312
  %83 = vst.msk [vmem:[%s1] sm:$0xff] %vm82, %v81
  %s84 = scalar_lea.vmem %s0, 12
  %s85 = smov 3
  %v86 = vld [vmem:[%s84] ss:$16 sm:%s85]
  %s87 = scalar_lea.vmem %s0, 12
  %s88 = smov 12
  %v89 = vld [vmem:[%s87] ss:$16 sm:%s88]
  %vm90 = vcmask 1043458
  %v91 = vsel %vm90, %v89, %v86
  %s92 = scalar_lea.vmem %s0, 12
  %s93 = smov 48
  %v94 = vld [vmem:[%s92] ss:$16 sm:%s93]
  %vm95 = vcmask 1045508
  %v96 = vsel %vm95, %v94, %v91
  %s97 = scalar_lea.vmem %s0, 12
  %s98 = smov 192
  %v99 = vld [vmem:[%s97] ss:$16 sm:%s98]
  %vm100 = vcmask 1047558
  %v101 = vsel %vm100, %v99, %v96
  %102 = vrot.lane.b32.xlu0 %v101, 96
  %v103 = vpop.permute.xlu0 %102
  %vm104 = vcmask 851712
  %105 = vst.msk [vmem:[%s1] sm:$0xff] %vm104, %v103
  %s106 = scalar_lea.vmem %s0, 11
  %s107 = smov 3
  %v108 = vld [vmem:[%s106] ss:$16 sm:%s107]
  %s109 = scalar_lea.vmem %s0, 11
  %s110 = smov 12
  %v111 = vld [vmem:[%s109] ss:$16 sm:%s110]
  %vm112 = vcmask 1043458
  %v113 = vsel %vm112, %v111, %v108
  %s114 = scalar_lea.vmem %s0, 11
  %s115 = smov 48
  %v116 = vld [vmem:[%s114] ss:$16 sm:%s115]
  %vm117 = vcmask 1045508
  %v118 = vsel %vm117, %v116, %v113
  %s119 = scalar_lea.vmem %s0, 11
  %s120 = smov 192
  %v121 = vld [vmem:[%s119] ss:$16 sm:%s120]
  %vm122 = vcmask 1047558
  %v123 = vsel %vm122, %v121, %v118
  %124 = vrot.lane.b32.xlu0 %v123, 88
  %v125 = vpop.permute.xlu0 %124
  %vm126 = vcmask 786112
  %127 = vst.msk [vmem:[%s1] sm:$0xff] %vm126, %v125
  %s128 = scalar_lea.vmem %s0, 10
  %s129 = smov 3
  %v130 = vld [vmem:[%s128] ss:$16 sm:%s129]
  %s131 = scalar_lea.vmem %s0, 10
  %s132 = smov 12
  %v133 = vld [vmem:[%s131] ss:$16 sm:%s132]
  %vm134 = vcmask 1043458
  %v135 = vsel %vm134, %v133, %v130
  %s136 = scalar_lea.vmem %s0, 10
  %s137 = smov 48
  %v138 = vld [vmem:[%s136] ss:$16 sm:%s137]
  %vm139 = vcmask 1045508
  %v140 = vsel %vm139, %v138, %v135
  %s141 = scalar_lea.vmem %s0, 10
  %s142 = smov 192
  %v143 = vld [vmem:[%s141] ss:$16 sm:%s142]
  %vm144 = vcmask 1047558
  %v145 = vsel %vm144, %v143, %v140
  %146 = vrot.lane.b32.xlu0 %v145, 80
  %v147 = vpop.permute.xlu0 %146
  %vm148 = vcmask 720512
  %149 = vst.msk [vmem:[%s1] sm:$0xff] %vm148, %v147
  %s150 = scalar_lea.vmem %s0, 9
  %s151 = smov 3
  %v152 = vld [vmem:[%s150] ss:$16 sm:%s151]
  %s153 = scalar_lea.vmem %s0, 9
  %s154 = smov 12
  %v155 = vld [vmem:[%s153] ss:$16 sm:%s154]
  %vm156 = vcmask 1043458
  %v157 = vsel %vm156, %v155, %v152
  %s158 = scalar_lea.vmem %s0, 9
  %s159 = smov 48
  %v160 = vld [vmem:[%s158] ss:$16 sm:%s159]
  %vm161 = vcmask 1045508
  %v162 = vsel %vm161, %v160, %v157
  %s163 = scalar_lea.vmem %s0, 9
  %s164 = smov 192
  %v165 = vld [vmem:[%s163] ss:$16 sm:%s164]
  %vm166 = vcmask 1047558
  %v167 = vsel %vm166, %v165, %v162
  %168 = vrot.lane.b32.xlu0 %v167, 72
  %v169 = vpop.permute.xlu0 %168
  %vm170 = vcmask 654912
  %171 = vst.msk [vmem:[%s1] sm:$0xff] %vm170, %v169
  %s172 = scalar_lea.vmem %s0, 8
  %s173 = smov 3
  %v174 = vld [vmem:[%s172] ss:$16 sm:%s173]
  %s175 = scalar_lea.vmem %s0, 8
  %s176 = smov 12
  %v177 = vld [vmem:[%s175] ss:$16 sm:%s176]
  %vm178 = vcmask 1043458
  %v179 = vsel %vm178, %v177, %v174
  %s180 = scalar_lea.vmem %s0, 8
  %s181 = smov 48
  %v182 = vld [vmem:[%s180] ss:$16 sm:%s181]
  %vm183 = vcmask 1045508
  %v184 = vsel %vm183, %v182, %v179
  %s185 = scalar_lea.vmem %s0, 8
  %s186 = smov 192
  %v187 = vld [vmem:[%s185] ss:$16 sm:%s186]
  %vm188 = vcmask 1047558
  %v189 = vsel %vm188, %v187, %v184
  %190 = vrot.lane.b32.xlu0 %v189, 64
  %v191 = vpop.permute.xlu0 %190
  %vm192 = vcmask 589312
  %193 = vst.msk [vmem:[%s1] sm:$0xff] %vm192, %v191
  %s194 = scalar_lea.vmem %s0, 7
  %s195 = smov 3
  %v196 = vld [vmem:[%s194] ss:$16 sm:%s195]
  %s197 = scalar_lea.vmem %s0, 7
  %s198 = smov 12
  %v199 = vld [vmem:[%s197] ss:$16 sm:%s198]
  %vm200 = vcmask 1043458
  %v201 = vsel %vm200, %v199, %v196
  %s202 = scalar_lea.vmem %s0, 7
  %s203 = smov 48
  %v204 = vld [vmem:[%s202] ss:$16 sm:%s203]
  %vm205 = vcmask 1045508
  %v206 = vsel %vm205, %v204, %v201
  %s207 = scalar_lea.vmem %s0, 7
  %s208 = smov 192
  %v209 = vld [vmem:[%s207] ss:$16 sm:%s208]
  %vm210 = vcmask 1047558
  %v211 = vsel %vm210, %v209, %v206
  %212 = vrot.lane.b32.xlu0 %v211, 56
  %v213 = vpop.permute.xlu0 %212
  %vm214 = vcmask 523712
  %215 = vst.msk [vmem:[%s1] sm:$0xff] %vm214, %v213
  %s216 = scalar_lea.vmem %s0, 6
  %s217 = smov 3
  %v218 = vld [vmem:[%s216] ss:$16 sm:%s217]
  %s219 = scalar_lea.vmem %s0, 6
  %s220 = smov 12
  %v221 = vld [vmem:[%s219] ss:$16 sm:%s220]
  %vm222 = vcmask 1043458
  %v223 = vsel %vm222, %v221, %v218
  %s224 = scalar_lea.vmem %s0, 6
  %s225 = smov 48
  %v226 = vld [vmem:[%s224] ss:$16 sm:%s225]
  %vm227 = vcmask 1045508
  %v228 = vsel %vm227, %v226, %v223
  %s229 = scalar_lea.vmem %s0, 6
  %s230 = smov 192
  %v231 = vld [vmem:[%s229] ss:$16 sm:%s230]
  %vm232 = vcmask 1047558
  %v233 = vsel %vm232, %v231, %v228
  %234 = vrot.lane.b32.xlu0 %v233, 48
  %v235 = vpop.permute.xlu0 %234
  %vm236 = vcmask 458112
  %237 = vst.msk [vmem:[%s1] sm:$0xff] %vm236, %v235
  %s238 = scalar_lea.vmem %s0, 5
  %s239 = smov 3
  %v240 = vld [vmem:[%s238] ss:$16 sm:%s239]
  %s241 = scalar_lea.vmem %s0, 5
  %s242 = smov 12
  %v243 = vld [vmem:[%s241] ss:$16 sm:%s242]
  %vm244 = vcmask 1043458
  %v245 = vsel %vm244, %v243, %v240
  %s246 = scalar_lea.vmem %s0, 5
  %s247 = smov 48
  %v248 = vld [vmem:[%s246] ss:$16 sm:%s247]
  %vm249 = vcmask 1045508
  %v250 = vsel %vm249, %v248, %v245
  %s251 = scalar_lea.vmem %s0, 5
  %s252 = smov 192
  %v253 = vld [vmem:[%s251] ss:$16 sm:%s252]
  %vm254 = vcmask 1047558
  %v255 = vsel %vm254, %v253, %v250
  %256 = vrot.lane.b32.xlu0 %v255, 40
  %v257 = vpop.permute.xlu0 %256
  %vm258 = vcmask 392512
  %259 = vst.msk [vmem:[%s1] sm:$0xff] %vm258, %v257
  %s260 = scalar_lea.vmem %s0, 4
  %s261 = smov 3
  %v262 = vld [vmem:[%s260] ss:$16 sm:%s261]
  %s263 = scalar_lea.vmem %s0, 4
  %s264 = smov 12
  %v265 = vld [vmem:[%s263] ss:$16 sm:%s264]
  %vm266 = vcmask 1043458
  %v267 = vsel %vm266, %v265, %v262
  %s268 = scalar_lea.vmem %s0, 4
  %s269 = smov 48
  %v270 = vld [vmem:[%s268] ss:$16 sm:%s269]
  %vm271 = vcmask 1045508
  %v272 = vsel %vm271, %v270, %v267
  %s273 = scalar_lea.vmem %s0, 4
  %s274 = smov 192
  %v275 = vld [vmem:[%s273] ss:$16 sm:%s274]
  %vm276 = vcmask 1047558
  %v277 = vsel %vm276, %v275, %v272
  %278 = vrot.lane.b32.xlu0 %v277, 32
  %v279 = vpop.permute.xlu0 %278
  %vm280 = vcmask 326912
  %281 = vst.msk [vmem:[%s1] sm:$0xff] %vm280, %v279
  %s282 = scalar_lea.vmem %s0, 3
  %s283 = smov 3
  %v284 = vld [vmem:[%s282] ss:$16 sm:%s283]
  %s285 = scalar_lea.vmem %s0, 3
  %s286 = smov 12
  %v287 = vld [vmem:[%s285] ss:$16 sm:%s286]
  %vm288 = vcmask 1043458
  %v289 = vsel %vm288, %v287, %v284
  %s290 = scalar_lea.vmem %s0, 3
  %s291 = smov 48
  %v292 = vld [vmem:[%s290] ss:$16 sm:%s291]
  %vm293 = vcmask 1045508
  %v294 = vsel %vm293, %v292, %v289
  %s295 = scalar_lea.vmem %s0, 3
  %s296 = smov 192
  %v297 = vld [vmem:[%s295] ss:$16 sm:%s296]
  %vm298 = vcmask 1047558
  %v299 = vsel %vm298, %v297, %v294
  %300 = vrot.lane.b32.xlu0 %v299, 24
  %v301 = vpop.permute.xlu0 %300
  %vm302 = vcmask 261312
  %303 = vst.msk [vmem:[%s1] sm:$0xff] %vm302, %v301
  %s304 = scalar_lea.vmem %s0, 2
  %s305 = smov 3
  %v306 = vld [vmem:[%s304] ss:$16 sm:%s305]
  %s307 = scalar_lea.vmem %s0, 2
  %s308 = smov 12
  %v309 = vld [vmem:[%s307] ss:$16 sm:%s308]
  %vm310 = vcmask 1043458
  %v311 = vsel %vm310, %v309, %v306
  %s312 = scalar_lea.vmem %s0, 2
  %s313 = smov 48
  %v314 = vld [vmem:[%s312] ss:$16 sm:%s313]
  %vm315 = vcmask 1045508
  %v316 = vsel %vm315, %v314, %v311
  %s317 = scalar_lea.vmem %s0, 2
  %s318 = smov 192
  %v319 = vld [vmem:[%s317] ss:$16 sm:%s318]
  %vm320 = vcmask 1047558
  %v321 = vsel %vm320, %v319, %v316
  %322 = vrot.lane.b32.xlu0 %v321, 16
  %v323 = vpop.permute.xlu0 %322
  %vm324 = vcmask 195712
  %325 = vst.msk [vmem:[%s1] sm:$0xff] %vm324, %v323
  %s326 = scalar_lea.vmem %s0, 1
  %s327 = smov 3
  %v328 = vld [vmem:[%s326] ss:$16 sm:%s327]
  %s329 = scalar_lea.vmem %s0, 1
  %s330 = smov 12
  %v331 = vld [vmem:[%s329] ss:$16 sm:%s330]
  %vm332 = vcmask 1043458
  %v333 = vsel %vm332, %v331, %v328
  %s334 = scalar_lea.vmem %s0, 1
  %s335 = smov 48
  %v336 = vld [vmem:[%s334] ss:$16 sm:%s335]
  %vm337 = vcmask 1045508
  %v338 = vsel %vm337, %v336, %v333
  %s339 = scalar_lea.vmem %s0, 1
  %s340 = smov 192
  %v341 = vld [vmem:[%s339] ss:$16 sm:%s340]
  %vm342 = vcmask 1047558
  %v343 = vsel %vm342, %v341, %v338
  %344 = vrot.lane.b32.xlu0 %v343, 8
  %v345 = vpop.permute.xlu0 %344
  %vm346 = vcmask 130112
  %347 = vst.msk [vmem:[%s1] sm:$0xff] %vm346, %v345

// kernel: double_conv_pallas.1
$region0: #{double_conv_pallas.1}
  #allocation0 [shape = 'u32[]', space=smem, size = 0x4, offset = 0x4, fixed_abs, tag = 'smem constant byte address 0x4 - core index']
  #allocation1 [shape = 'u32[144,128]{1,0:T(1,128)}', space=vmem, size = 0x12000, scoped, tag = 'internal scratch']
  %s0 = inlined_call_operand.vmem [shape: bf16[32,64], index: 0, kind: input, shape index: {}]
  %s1 = inlined_call_operand.vmem [shape: bf16[192,128], index: 1, kind: input, shape index: {}]
  %s2 = inlined_call_operand.vmem [shape: bf16[384,128], index: 2, kind: input, shape index: {}]
  %s3 = inlined_call_operand.vmem [shape: f32[1,8], index: 3, kind: input, shape index: {}]
  %s4 = inlined_call_operand.vmem [shape: f32[1,128], index: 4, kind: input, shape index: {}]
  %s5 = inlined_call_operand.vmem [shape: f32[1,8], index: 5, kind: input, shape index: {}]
  %s6 = inlined_call_operand.vmem [shape: f32[1,128], index: 6, kind: input, shape index: {}]
  %s7 = inlined_call_operand.vmem [shape: f32[128,8], index: 7, kind: input, shape index: {}, may-alias: {7,9}]
  %s8 = inlined_call_operand.vmem [shape: f32[8,128], index: 8, kind: input, shape index: {}, may-alias: {8,10}]
  %s9 = inlined_call_operand.vmem [shape: f32[128,8], index: 9, kind: input, shape index: {}, may-alias: {7,9}]
  %s10 = inlined_call_operand.vmem [shape: f32[8,128], index: 10, kind: input, shape index: {}, may-alias: {8,10}]
  %s11 = inlined_call_operand.vmem [shape: f32[32,128], index: 11, kind: output, shape index: {}]
  %s12 = sld [smem:[#allocation0]]
  $region54: #{double_conv_pallas.1} parent=0
    _
  %s14 = ssub.s32 1, %s12
  %s15 = scalar_select 0, %s14, %s12
  // Predicated region
  $region2: #{double_conv_pallas.1} parent=0 // pred_check
    _
  $region3: #{double_conv_pallas.1} parent=0 // pred_check_branch
    %17 = sbr.rel (0) target = $region5
  $region4: #{double_conv_pallas.1} parent=0 // pred_region
    _
  $region5: #{double_conv_pallas.1} parent=0 // pred_fallthru
    _
  // Predicated region
  $region6: #{double_conv_pallas.1} parent=0 // pred_check
    _
  $region7: #{double_conv_pallas.1} parent=0 // pred_check_branch
    %19 = sbr.rel (0) target = $region9
  $region8: #{double_conv_pallas.1} parent=0 // pred_region
    _
  $region9: #{double_conv_pallas.1} parent=0 // pred_fallthru
    _
  // Predicated region
  $region10: #{double_conv_pallas.1} parent=0 // pred_check
    _
  $region11: #{double_conv_pallas.1} parent=0 // pred_check_branch
    %21 = sbr.rel (0) target = $region13
  $region12: #{double_conv_pallas.1} parent=0 // pred_region
    _
  $region13: #{double_conv_pallas.1} parent=0 // pred_fallthru
    _
  // Predicated region
  $region14: #{double_conv_pallas.1} parent=0 // pred_check
    _
  $region15: #{double_conv_pallas.1} parent=0 // pred_check_branch
    %23 = sbr.rel (0) target = $region17
  $region16: #{double_conv_pallas.1} parent=0 // pred_region
    _
  $region17: #{double_conv_pallas.1} parent=0 // pred_fallthru
    _
  // Predicated region
  $region18: #{double_conv_pallas.1} parent=0 // pred_check
    _
  $region19: #{double_conv_pallas.1} parent=0 // pred_check_branch
    %25 = sbr.rel (0) target = $region21
  $region20: #{double_conv_pallas.1} parent=0 // pred_region
    _
  $region21: #{double_conv_pallas.1} parent=0 // pred_fallthru
    _
  // Predicated region
  $region22: #{double_conv_pallas.1} parent=0 // pred_check
    _
  $region23: #{double_conv_pallas.1} parent=0 // pred_check_branch
    %27 = sbr.rel (0) target = $region25
  $region24: #{double_conv_pallas.1} parent=0 // pred_region
    _
  $region25: #{double_conv_pallas.1} parent=0 // pred_fallthru
    _
  // Predicated region
  $region26: #{double_conv_pallas.1} parent=0 // pred_check
    _
  $region27: #{double_conv_pallas.1} parent=0 // pred_check_branch
    %29 = sbr.rel (0) target = $region29
  $region28: #{double_conv_pallas.1} parent=0 // pred_region
    _
  $region29: #{double_conv_pallas.1} parent=0 // pred_fallthru
    _
  // Predicated region
  $region30: #{double_conv_pallas.1} parent=0 // pred_check
    _
  $region31: #{double_conv_pallas.1} parent=0 // pred_check_branch
    %31 = sbr.rel (0) target = $region33
  $region32: #{double_conv_pallas.1} parent=0 // pred_region
    _
  $region33: #{double_conv_pallas.1} parent=0 // pred_fallthru
    _
  // Predicated region
  $region34: #{double_conv_pallas.1} parent=0 // pred_check
    _
  $region35: #{double_conv_pallas.1} parent=0 // pred_check_branch
    %33 = sbr.rel (0) target = $region37
  $region36: #{double_conv_pallas.1} parent=0 // pred_region
    _
  $region37: #{double_conv_pallas.1} parent=0 // pred_fallthru
    _
  // Predicated region
  $region38: #{double_conv_pallas.1} parent=0 // pred_check
    _
  $region39: #{double_conv_pallas.1} parent=0 // pred_check_branch
    %35 = sbr.rel (0) target = $region41
  $region40: #{double_conv_pallas.1} parent=0 // pred_region
    _
  $region41: #{double_conv_pallas.1} parent=0 // pred_fallthru
    _
  // Predicated region
  $region42: #{double_conv_pallas.1} parent=0 // pred_check
    _
  $region43: #{double_conv_pallas.1} parent=0 // pred_check_branch
    %37 = sbr.rel (0) target = $region45
  $region44: #{double_conv_pallas.1} parent=0 // pred_region
    _
  $region45: #{double_conv_pallas.1} parent=0 // pred_fallthru
    _
  %v39 = vld [vmem:[%s0] sm:$0xf]
  %v40 = vld [vmem:[%s0 + $0x4] sm:$0xf]
  %v41 = vld [vmem:[%s0 + $0x8] sm:$0xf]
  %v42 = vld [vmem:[%s0 + $0xc] sm:$0xf]
  %v45 = vunpack.c.l.b16 %v39
  %v46 = vunpack.c.l.b16 %v40
  %v47 = vpack.c.b16 %v46, %v45
  %v49 = vshrl.u32 %v47, 16
  %v51 = vrot.slane %v49, 7
  %v52 = vshll.u32 %v47, 16
  %v54 = vor.u32 %v51, %v52
  %v58 = vunpack.c.l.b16 %v41
  %v59 = vunpack.c.l.b16 %v42
  %v60 = vpack.c.b16 %v59, %v58
  %v62 = vshrl.u32 %v60, 16
  %v64 = vrot.slane %v62, 7
  %v65 = vshll.u32 %v60, 16
  %v67 = vor.u32 %v64, %v65
  %vm69 = vcmask 1040384
  %vm70 = vsmask.f32 256
  %vm71 = vmand %vm69, %vm70
  %v72 = vsel %vm71, 0, %v54
  %v73 = vsel %vm71, 0, %v67
  %v74 = vrot.slane %v52, 1
  %v75 = vor.u32 %v49, %v74
  %v77 = vrot.slane %v65, 1
  %v78 = vor.u32 %v62, %v77
  %vm80 = vcmask 1047552
  %vm81 = vsmask.f32 7424
  %vm82 = vmand %vm80, %vm81
  %v83 = vsel %vm82, %v75, 0
  %v84 = vsel %vm82, %v78, 0
  %v85 = vld [vmem:[%s1] sm:$0xf]
  %v86 = vld [vmem:[%s1 + $0x4] sm:$0xf]
  %v87 = vld [vmem:[%s1 + $0x8] sm:$0xf]
  %v88 = vld [vmem:[%s1 + $0xc] sm:$0xf]
  %v89 = vld [vmem:[%s1 + $0x10] sm:$0xf]
  %v90 = vld [vmem:[%s1 + $0x14] sm:$0xf]
  %v91 = vld [vmem:[%s1 + $0x18] sm:$0xf]
  %v92 = vld [vmem:[%s1 + $0x1c] sm:$0xf]
  %v93 = vld [vmem:[%s1 + $0x20] sm:$0xf]
  %v94 = vld [vmem:[%s1 + $0x24] sm:$0xf]
  %v95 = vld [vmem:[%s1 + $0x28] sm:$0xf]
  %v96 = vld [vmem:[%s1 + $0x2c] sm:$0xf]
  %v97 = vld [vmem:[%s1 + $0x30] sm:$0xf]
  %v98 = vld [vmem:[%s1 + $0x34] sm:$0xf]
  %v99 = vld [vmem:[%s1 + $0x38] sm:$0xf]
  %v100 = vld [vmem:[%s1 + $0x3c] sm:$0xf]
  %v109 = vunpack.c.l.b16 %v93
  %v110 = vunpack.c.l.b16 %v94
  %v111 = vunpack.c.l.b16 %v95
  %v112 = vunpack.c.l.b16 %v96
  %v113 = vunpack.c.l.b16 %v97
  %v114 = vunpack.c.l.b16 %v98
  %v115 = vunpack.c.l.b16 %v99
  %v116 = vunpack.c.l.b16 %v100
  %v117 = vpack.c.b16 %v110, %v109
  %v118 = vpack.c.b16 %v112, %v111
  %v119 = vpack.c.b16 %v114, %v113
  %v120 = vpack.c.b16 %v116, %v115
  %vm125 = vcmask 523264
  %v126 = vsel %vm125, %v47, 0
  %v128 = vsel %vm125, %v60, 0
  %130 = vmatprep.subr.bf16.mxu0 0
  %131 = vmatpush1.bf16.msra.mxu0 0
  %132 = vmatprep.subr.bf16.mxu0 0
  %133 = vmatpush1.bf16.msra.mxu0 0
  %134 = vmatprep.subr.bf16.mxu0 0
  %135 = vmatpush1.bf16.msra.mxu0 0
  %136 = vmatprep.subr.bf16.mxu0 0
  %137 = vmatpush1.bf16.msra.mxu0 0
  %138 = vmatprep.subr.bf16.mxu0 0
  %139 = vmatpush1.bf16.msra.mxu0 %v120
  %140 = vmatprep.subr.bf16.mxu0 0
  %141 = vmatpush1.bf16.msra.mxu0 %v119
  %142 = vmatprep.subr.bf16.mxu0 0
  %143 = vmatpush1.bf16.msra.mxu0 %v118
  %144 = vmatprep.subr.bf16.mxu0 0
  %145 = vmatpush1.bf16.msra.mxu0 %v117
  %146 = vmatprep.subr.bf16.mxu0 0
  %147 = vmatpush2.bf16.msra.mxu0 0
  %148 = vmatprep.subr.bf16.mxu0 0
  %149 = vmatpush2.bf16.msra.mxu0 0
  %150 = vmatprep.subr.bf16.mxu0 0
  %151 = vmatpush2.bf16.msra.mxu0 0
  %152 = vmatprep.subr.bf16.mxu0 0
  %153 = vmatpush2.bf16.msra.mxu0 0
  %154 = vmatprep.subr.bf16.mxu0 0
  %155 = vmatpush2.bf16.msra.mxu0 0
  %156 = vmatprep.subr.bf16.mxu0 0
  %157 = vmatpush2.bf16.msra.mxu0 0
  %158 = vmatprep.subr.bf16.mxu0 0
  %159 = vmatpush2.bf16.msra.mxu0 0
  %160 = vmatprep.subr.bf16.mxu0 0
  %161 = vmatpush2.bf16.msra.mxu0 0
  %162 = vmatprep.mubr.bf16.mxu0 0
  %163 = vmatmul.mubr.bf16.gmra.mxu0 %v126
  %v164 = vpop.f32.mrf.mxu0
  %v165 = vadd.f32 0.0, %v164
  %v166 = vpop.f32.mrf.mxu0
  %v167 = vpop.f32.mrf.mxu0
  %v168 = vadd.f32 0.0, %v167
  %v169 = vpop.f32.mrf.mxu0
  %170 = vmatprep.mubr.bf16.mxu0 0
  %171 = vmatmul.mubr.bf16.gmra.mxu0 %v128
  %v172 = vpop.f32.mrf.mxu0
  %v173 = vadd.f32 0.0, %v172
  %v174 = vpop.f32.mrf.mxu0
  %v175 = vpop.f32.mrf.mxu0
  %v176 = vadd.f32 0.0, %v175
  %v177 = vpop.f32.mrf.mxu0
  %178 = vdwg.mxu0
  %v187 = vunpack.c.l.b16 %v85
  %v188 = vunpack.c.l.b16 %v86
  %v189 = vunpack.c.l.b16 %v87
  %v190 = vunpack.c.l.b16 %v88
  %v191 = vunpack.c.l.b16 %v89
  %v192 = vunpack.c.l.b16 %v90
  %v193 = vunpack.c.l.b16 %v91
  %v194 = vunpack.c.l.b16 %v92
  %v195 = vpack.c.b16 %v188, %v187
  %v196 = vpack.c.b16 %v190, %v189
  %v197 = vpack.c.b16 %v192, %v191
  %v198 = vpack.c.b16 %v194, %v193
  %v204 = vsel %vm125, %v72, 0
  %v207 = vsel %vm125, %v73, 0
  %209 = vmatprep.subr.bf16.mxu0 0
  %210 = vmatpush1.bf16.msra.mxu0 0
  %211 = vmatprep.subr.bf16.mxu0 0
  %212 = vmatpush1.bf16.msra.mxu0 0
  %213 = vmatprep.subr.bf16.mxu0 0
  %214 = vmatpush1.bf16.msra.mxu0 0
  %215 = vmatprep.subr.bf16.mxu0 0
  %216 = vmatpush1.bf16.msra.mxu0 0
  %217 = vmatprep.subr.bf16.mxu0 0
  %218 = vmatpush1.bf16.msra.mxu0 %v198
  %219 = vmatprep.subr.bf16.mxu0 0
  %220 = vmatpush1.bf16.msra.mxu0 %v197
  %221 = vmatprep.subr.bf16.mxu0 0
  %222 = vmatpush1.bf16.msra.mxu0 %v196
  %223 = vmatprep.subr.bf16.mxu0 0
  %224 = vmatpush1.bf16.msra.mxu0 %v195
  %225 = vmatprep.subr.bf16.mxu0 0
  %226 = vmatpush2.bf16.msra.mxu0 0
  %227 = vmatprep.subr.bf16.mxu0 0
  %228 = vmatpush2.bf16.msra.mxu0 0
  %229 = vmatprep.subr.bf16.mxu0 0
  %230 = vmatpush2.bf16.msra.mxu0 0
  %231 = vmatprep.subr.bf16.mxu0 0
  %232 = vmatpush2.bf16.msra.mxu0 0
  %233 = vmatprep.subr.bf16.mxu0 0
  %234 = vmatpush2.bf16.msra.mxu0 0
  %235 = vmatprep.subr.bf16.mxu0 0
  %236 = vmatpush2.bf16.msra.mxu0 0
  %237 = vmatprep.subr.bf16.mxu0 0
  %238 = vmatpush2.bf16.msra.mxu0 0
  %239 = vmatprep.subr.bf16.mxu0 0
  %240 = vmatpush2.bf16.msra.mxu0 0
  %241 = vmatprep.mubr.bf16.mxu0 0
  %242 = vmatmul.mubr.bf16.gmra.mxu0 %v204
  %v243 = vpop.f32.mrf.mxu0
  %v244 = vadd.f32 %v165, %v243
  %v245 = vpop.f32.mrf.mxu0
  %v246 = vpop.f32.mrf.mxu0
  %v247 = vadd.f32 %v168, %v246
  %v248 = vpop.f32.mrf.mxu0
  %249 = vmatprep.mubr.bf16.mxu0 0
  %250 = vmatmul.mubr.bf16.gmra.mxu0 %v207
  %v251 = vpop.f32.mrf.mxu0
  %v252 = vadd.f32 %v173, %v251
  %v253 = vpop.f32.mrf.mxu0
  %v254 = vpop.f32.mrf.mxu0
  %v255 = vadd.f32 %v176, %v254
  %v256 = vpop.f32.mrf.mxu0
  %257 = vdwg.mxu0
  %v258 = vld [vmem:[%s1 + $0x40] sm:$0xf]
  %v259 = vld [vmem:[%s1 + $0x44] sm:$0xf]
  %v260 = vld [vmem:[%s1 + $0x48] sm:$0xf]
  %v261 = vld [vmem:[%s1 + $0x4c] sm:$0xf]
  %v262 = vld [vmem:[%s1 + $0x50] sm:$0xf]
  %v263 = vld [vmem:[%s1 + $0x54] sm:$0xf]
  %v264 = vld [vmem:[%s1 + $0x58] sm:$0xf]
  %v265 = vld [vmem:[%s1 + $0x5c] sm:$0xf]
  %v274 = vunpack.c.l.b16 %v258
  %v275 = vunpack.c.l.b16 %v259
  %v276 = vunpack.c.l.b16 %v260
  %v277 = vunpack.c.l.b16 %v261
  %v278 = vunpack.c.l.b16 %v262
  %v279 = vunpack.c.l.b16 %v263
  %v280 = vunpack.c.l.b16 %v264
  %v281 = vunpack.c.l.b16 %v265
  %v282 = vpack.c.b16 %v275, %v274
  %v283 = vpack.c.b16 %v277, %v276
  %v284 = vpack.c.b16 %v279, %v278
  %v285 = vpack.c.b16 %v281, %v280
  %v291 = vsel %vm125, %v83, 0
  %v294 = vsel %vm125, %v84, 0
  %296 = vmatprep.subr.bf16.mxu0 0
  %297 = vmatpush1.bf16.msra.mxu0 0
  %298 = vmatprep.subr.bf16.mxu0 0
  %299 = vmatpush1.bf16.msra.mxu0 0
  %300 = vmatprep.subr.bf16.mxu0 0
  %301 = vmatpush1.bf16.msra.mxu0 0
  %302 = vmatprep.subr.bf16.mxu0 0
  %303 = vmatpush1.bf16.msra.mxu0 0
  %304 = vmatprep.subr.bf16.mxu0 0
  %305 = vmatpush1.bf16.msra.mxu0 %v285
  %306 = vmatprep.subr.bf16.mxu0 0
  %307 = vmatpush1.bf16.msra.mxu0 %v284
  %308 = vmatprep.subr.bf16.mxu0 0
  %309 = vmatpush1.bf16.msra.mxu0 %v283
  %310 = vmatprep.subr.bf16.mxu0 0
  %311 = vmatpush1.bf16.msra.mxu0 %v282
  %312 = vmatprep.subr.bf16.mxu0 0
  %313 = vmatpush2.bf16.msra.mxu0 0
  %314 = vmatprep.subr.bf16.mxu0 0
  %315 = vmatpush2.bf16.msra.mxu0 0
  %316 = vmatprep.subr.bf16.mxu0 0
  %317 = vmatpush2.bf16.msra.mxu0 0
  %318 = vmatprep.subr.bf16.mxu0 0
  %319 = vmatpush2.bf16.msra.mxu0 0
  %320 = vmatprep.subr.bf16.mxu0 0
  %321 = vmatpush2.bf16.msra.mxu0 0
  %322 = vmatprep.subr.bf16.mxu0 0
  %323 = vmatpush2.bf16.msra.mxu0 0
  %324 = vmatprep.subr.bf16.mxu0 0
  %325 = vmatpush2.bf16.msra.mxu0 0
  %326 = vmatprep.subr.bf16.mxu0 0
  %327 = vmatpush2.bf16.msra.mxu0 0
  %328 = vmatprep.mubr.bf16.mxu0 0
  %329 = vmatmul.mubr.bf16.gmra.mxu0 %v291
  %v330 = vpop.f32.mrf.mxu0
  %v331 = vadd.f32 0.0, %v330
  %v332 = vpop.f32.mrf.mxu0
  %v333 = vpop.f32.mrf.mxu0
  %v334 = vadd.f32 0.0, %v333
  %v335 = vpop.f32.mrf.mxu0
  %336 = vmatprep.mubr.bf16.mxu0 0
  %337 = vmatmul.mubr.bf16.gmra.mxu0 %v294
  %v338 = vpop.f32.mrf.mxu0
  %v339 = vadd.f32 0.0, %v338
  %v340 = vpop.f32.mrf.mxu0
  %v341 = vpop.f32.mrf.mxu0
  %v342 = vadd.f32 0.0, %v341
  %v343 = vpop.f32.mrf.mxu0
  %344 = vdwg.mxu0
  %v345 = vadd.f32 %v244, %v331
  %v346 = vadd.f32 %v247, %v334
  %v347 = vadd.f32 %v252, %v339
  %v348 = vadd.f32 %v255, %v342
  %v349 = vld [vmem:[%s3] sm:$0x1]
  %v350 = vld [vmem:[%s4] sm:$0x1]
  %v351 = vld [vmem:[%s7] sm:$0xff]
  %v352 = vld [vmem:[%s7 + $0x8] sm:$0xff]
  %v353 = vld [vmem:[%s7 + $0x10] sm:$0xff]
  %v354 = vld [vmem:[%s7 + $0x18] sm:$0xff]
  %v355 = vld [vmem:[%s7 + $0x20] sm:$0xff]
  %v356 = vld [vmem:[%s7 + $0x28] sm:$0xff]
  %v357 = vld [vmem:[%s7 + $0x30] sm:$0xff]
  %v358 = vld [vmem:[%s7 + $0x38] sm:$0xff]
  %v359 = vld [vmem:[%s7 + $0x40] sm:$0xff]
  %v360 = vld [vmem:[%s7 + $0x48] sm:$0xff]
  %v361 = vld [vmem:[%s7 + $0x50] sm:$0xff]
  %v362 = vld [vmem:[%s7 + $0x58] sm:$0xff]
  %v363 = vld [vmem:[%s7 + $0x60] sm:$0xff]
  %v364 = vld [vmem:[%s7 + $0x68] sm:$0xff]
  %v365 = vld [vmem:[%s7 + $0x70] sm:$0xff]
  %v366 = vld [vmem:[%s7 + $0x78] sm:$0xff]
  %v367 = vld [vmem:[%s8] sm:$0xff]
  %v368 = vadd.f32 %v345, %v346
  %v369 = vadd.f32 %v368, %v347
  %v370 = vadd.f32 %v369, %v348
  %v371 = vrot.slane %v370, 4
  %v372 = vadd.f32 %v370, %v371
  %v373 = vrot.slane %v372, 2
  %v374 = vadd.f32 %v372, %v373
  %v375 = vrot.slane %v374, 1
  %v376 = vadd.f32 %v374, %v375
  %377 = vmatprep.subr.mxu0 0.0
  %378 = vmatpush1.msra.mxu0 %v366
  %379 = vmatprep.subr.mxu0 0.0
  %380 = vmatpush1.msra.mxu0 %v365
  %381 = vmatprep.subr.mxu0 0.0
  %382 = vmatpush1.msra.mxu0 %v364
  %383 = vmatprep.subr.mxu0 0.0
  %384 = vmatpush1.msra.mxu0 %v363
  %385 = vmatprep.subr.mxu0 0.0
  %386 = vmatpush1.msra.mxu0 %v362
  %387 = vmatprep.subr.mxu0 0.0
  %388 = vmatpush1.msra.mxu0 %v361
  %389 = vmatprep.subr.mxu0 0.0
  %390 = vmatpush1.msra.mxu0 %v360
  %391 = vmatprep.subr.mxu0 0.0
  %392 = vmatpush1.msra.mxu0 %v359
  %393 = vmatprep.subr.mxu0 0.0
  %394 = vmatpush1.msra.mxu0 %v358
  %395 = vmatprep.subr.mxu0 0.0
  %396 = vmatpush1.msra.mxu0 %v357
  %397 = vmatprep.subr.mxu0 0.0
  %398 = vmatpush1.msra.mxu0 %v356
  %399 = vmatprep.subr.mxu0 0.0
  %400 = vmatpush1.msra.mxu0 %v355
  %401 = vmatprep.subr.mxu0 0.0
  %402 = vmatpush1.msra.mxu0 %v354
  %403 = vmatprep.subr.mxu0 0.0
  %404 = vmatpush1.msra.mxu0 %v353
  %405 = vmatprep.subr.mxu0 0.0
  %406 = vmatpush1.msra.mxu0 %v352
  %407 = vmatprep.subr.mxu0 0.0
  %408 = vmatpush1.msra.mxu0 %v351
  %409 = vmatprep.subr.mxu0 0.0
  %410 = vmatpush2.msra.mxu0 0.0
  %411 = vmatprep.subr.mxu0 0.0
  %412 = vmatpush2.msra.mxu0 0.0
  %413 = vmatprep.subr.mxu0 0.0
  %414 = vmatpush2.msra.mxu0 0.0
  %415 = vmatprep.subr.mxu0 0.0
  %416 = vmatpush2.msra.mxu0 0.0
  %417 = vmatprep.subr.mxu0 0.0
  %418 = vmatpush2.msra.mxu0 0.0
  %419 = vmatprep.subr.mxu0 0.0
  %420 = vmatpush2.msra.mxu0 0.0
  %421 = vmatprep.subr.mxu0 0.0
  %422 = vmatpush2.msra.mxu0 0.0
  %423 = vmatprep.subr.mxu0 0.0
  %424 = vmatpush2.msra.mxu0 0.0
  %425 = vmatprep.subr.mxu0 0.0
  %426 = vmatpush2.msra.mxu0 0.0
  %427 = vmatprep.subr.mxu0 0.0
  %428 = vmatpush2.msra.mxu0 0.0
  %429 = vmatprep.subr.mxu0 0.0
  %430 = vmatpush2.msra.mxu0 0.0
  %431 = vmatprep.subr.mxu0 0.0
  %432 = vmatpush2.msra.mxu0 0.0
  %433 = vmatprep.subr.mxu0 0.0
  %434 = vmatpush2.msra.mxu0 0.0
  %435 = vmatprep.subr.mxu0 0.0
  %436 = vmatpush2.msra.mxu0 0.0
  %437 = vmatprep.subr.mxu0 0.0
  %438 = vmatpush2.msra.mxu0 0.0
  %439 = vmatprep.subr.mxu0 0.0
  %440 = vmatpush2.msra.mxu0 0.0
  %441 = vmatprep.mubr.f32.mxu0 0.0
  %442 = vmatmul.mubr.f32.gmra.mxu0 %v376
  %v443 = vpop.f32.mrf.mxu0
  %v444 = vadd.f32 0.0, %v443
  %v445 = vpop.f32.mrf.mxu0
  %446 = vdwg.mxu0
  %v447 = vmul.f32 %v444, 0.001953125
  %vm448 = vcmask 64512
  %v450 = vsel %vm448, %v447, 0
  %452 = vmatprep.subr.mxu0 0.0
  %453 = vmatpush1.msra.mxu0 0.0
  %454 = vmatprep.subr.mxu0 0.0
  %455 = vmatpush1.msra.mxu0 0.0
  %456 = vmatprep.subr.mxu0 0.0
  %457 = vmatpush1.msra.mxu0 0.0
  %458 = vmatprep.subr.mxu0 0.0
  %459 = vmatpush1.msra.mxu0 0.0
  %460 = vmatprep.subr.mxu0 0.0
  %461 = vmatpush1.msra.mxu0 0.0
  %462 = vmatprep.subr.mxu0 0.0
  %463 = vmatpush1.msra.mxu0 0.0
  %464 = vmatprep.subr.mxu0 0.0
  %465 = vmatpush1.msra.mxu0 0.0
  %466 = vmatprep.subr.mxu0 0.0
  %467 = vmatpush1.msra.mxu0 0.0
  %468 = vmatprep.subr.mxu0 0.0
  %469 = vmatpush1.msra.mxu0 0.0
  %470 = vmatprep.subr.mxu0 0.0
  %471 = vmatpush1.msra.mxu0 0.0
  %472 = vmatprep.subr.mxu0 0.0
  %473 = vmatpush1.msra.mxu0 0.0
  %474 = vmatprep.subr.mxu0 0.0
  %475 = vmatpush1.msra.mxu0 0.0
  %476 = vmatprep.subr.mxu0 0.0
  %477 = vmatpush1.msra.mxu0 0.0
  %478 = vmatprep.subr.mxu0 0.0
  %479 = vmatpush1.msra.mxu0 0.0
  %480 = vmatprep.subr.mxu0 0.0
  %481 = vmatpush1.msra.mxu0 0.0
  %482 = vmatprep.subr.mxu0 0.0
  %483 = vmatpush1.msra.mxu0 %v367
  %484 = vmatprep.subr.mxu0 0.0
  %485 = vmatpush2.msra.mxu0 0.0
  %486 = vmatprep.subr.mxu0 0.0
  %487 = vmatpush2.msra.mxu0 0.0
  %488 = vmatprep.subr.mxu0 0.0
  %489 = vmatpush2.msra.mxu0 0.0
  %490 = vmatprep.subr.mxu0 0.0
  %491 = vmatpush2.msra.mxu0 0.0
  %492 = vmatprep.subr.mxu0 0.0
  %493 = vmatpush2.msra.mxu0 0.0
  %494 = vmatprep.subr.mxu0 0.0
  %495 = vmatpush2.msra.mxu0 0.0
  %496 = vmatprep.subr.mxu0 0.0
  %497 = vmatpush2.msra.mxu0 0.0
  %498 = vmatprep.subr.mxu0 0.0
  %499 = vmatpush2.msra.mxu0 0.0
  %500 = vmatprep.subr.mxu0 0.0
  %501 = vmatpush2.msra.mxu0 0.0
  %502 = vmatprep.subr.mxu0 0.0
  %503 = vmatpush2.msra.mxu0 0.0
  %504 = vmatprep.subr.mxu0 0.0
  %505 = vmatpush2.msra.mxu0 0.0
  %506 = vmatprep.subr.mxu0 0.0
  %507 = vmatpush2.msra.mxu0 0.0
  %508 = vmatprep.subr.mxu0 0.0
  %509 = vmatpush2.msra.mxu0 0.0
  %510 = vmatprep.subr.mxu0 0.0
  %511 = vmatpush2.msra.mxu0 0.0
  %512 = vmatprep.subr.mxu0 0.0
  %513 = vmatpush2.msra.mxu0 0.0
  %514 = vmatprep.subr.mxu0 0.0
  %515 = vmatpush2.msra.mxu0 0.0
  %516 = vmatprep.mubr.f32.mxu0 0.0
  %517 = vmatmul.mubr.f32.gmra.mxu0 %v450
  %v518 = vpop.f32.mrf.mxu0
  %v519 = vadd.f32 0.0, %v518
  %v520 = vpop.f32.mrf.mxu0
  %521 = vdwg.mxu0
  %v522 = vlaneseq
  %v523 = vshrl.u32 %v522, 7
  %v524 = vsub.s32 0, %v523
  %v525 = vrot.slane %v519, %v524
  %v526 = vsub.f32 %v345, %v525
  %v527 = vsub.f32 %v346, %v525
  %v528 = vsub.f32 %v347, %v525
  %v529 = vsub.f32 %v348, %v525
  %v530 = vmul.f32 %v526, %v526
  %v531 = vmul.f32 %v527, %v527
  %v532 = vmul.f32 %v528, %v528
  %v533 = vmul.f32 %v529, %v529
  %v534 = vadd.f32 %v530, %v531
  %v535 = vadd.f32 %v534, %v532
  %v536 = vadd.f32 %v535, %v533
  %v537 = vrot.slane %v536, 4
  %v538 = vadd.f32 %v536, %v537
  %v539 = vrot.slane %v538, 2
  %v540 = vadd.f32 %v538, %v539
  %v541 = vrot.slane %v540, 1
  %v542 = vadd.f32 %v540, %v541
  %543 = vmatprep.subr.mxu0 0.0
  %544 = vmatpush1.msra.mxu0 %v366
  %545 = vmatprep.subr.mxu0 0.0
  %546 = vmatpush1.msra.mxu0 %v365
  %547 = vmatprep.subr.mxu0 0.0
  %548 = vmatpush1.msra.mxu0 %v364
  %549 = vmatprep.subr.mxu0 0.0
  %550 = vmatpush1.msra.mxu0 %v363
  %551 = vmatprep.subr.mxu0 0.0
  %552 = vmatpush1.msra.mxu0 %v362
  %553 = vmatprep.subr.mxu0 0.0
  %554 = vmatpush1.msra.mxu0 %v361
  %555 = vmatprep.subr.mxu0 0.0
  %556 = vmatpush1.msra.mxu0 %v360
  %557 = vmatprep.subr.mxu0 0.0
  %558 = vmatpush1.msra.mxu0 %v359
  %559 = vmatprep.subr.mxu0 0.0
  %560 = vmatpush1.msra.mxu0 %v358
  %561 = vmatprep.subr.mxu0 0.0
  %562 = vmatpush1.msra.mxu0 %v357
  %563 = vmatprep.subr.mxu0 0.0
  %564 = vmatpush1.msra.mxu0 %v356
  %565 = vmatprep.subr.mxu0 0.0
  %566 = vmatpush1.msra.mxu0 %v355
  %567 = vmatprep.subr.mxu0 0.0
  %568 = vmatpush1.msra.mxu0 %v354
  %569 = vmatprep.subr.mxu0 0.0
  %570 = vmatpush1.msra.mxu0 %v353
  %571 = vmatprep.subr.mxu0 0.0
  %572 = vmatpush1.msra.mxu0 %v352
  %573 = vmatprep.subr.mxu0 0.0
  %574 = vmatpush1.msra.mxu0 %v351
  %575 = vmatprep.subr.mxu0 0.0
  %576 = vmatpush2.msra.mxu0 0.0
  %577 = vmatprep.subr.mxu0 0.0
  %578 = vmatpush2.msra.mxu0 0.0
  %579 = vmatprep.subr.mxu0 0.0
  %580 = vmatpush2.msra.mxu0 0.0
  %581 = vmatprep.subr.mxu0 0.0
  %582 = vmatpush2.msra.mxu0 0.0
  %583 = vmatprep.subr.mxu0 0.0
  %584 = vmatpush2.msra.mxu0 0.0
  %585 = vmatprep.subr.mxu0 0.0
  %586 = vmatpush2.msra.mxu0 0.0
  %587 = vmatprep.subr.mxu0 0.0
  %588 = vmatpush2.msra.mxu0 0.0
  %589 = vmatprep.subr.mxu0 0.0
  %590 = vmatpush2.msra.mxu0 0.0
  %591 = vmatprep.subr.mxu0 0.0
  %592 = vmatpush2.msra.mxu0 0.0
  %593 = vmatprep.subr.mxu0 0.0
  %594 = vmatpush2.msra.mxu0 0.0
  %595 = vmatprep.subr.mxu0 0.0
  %596 = vmatpush2.msra.mxu0 0.0
  %597 = vmatprep.subr.mxu0 0.0
  %598 = vmatpush2.msra.mxu0 0.0
  %599 = vmatprep.subr.mxu0 0.0
  %600 = vmatpush2.msra.mxu0 0.0
  %601 = vmatprep.subr.mxu0 0.0
  %602 = vmatpush2.msra.mxu0 0.0
  %603 = vmatprep.subr.mxu0 0.0
  %604 = vmatpush2.msra.mxu0 0.0
  %605 = vmatprep.subr.mxu0 0.0
  %606 = vmatpush2.msra.mxu0 0.0
  %607 = vmatprep.mubr.f32.mxu0 0.0
  %608 = vmatmul.mubr.f32.gmra.mxu0 %v542
  %v609 = vpop.f32.mrf.mxu0
  %v610 = vadd.f32 0.0, %v609
  %v611 = vpop.f32.mrf.mxu0
  %612 = vdwg.mxu0
  %v613 = vmul.f32 %v610, 0.001953125
  %v614 = vadd.f32 %v613, 1e-05
  %v615 = vrsqrt.pop %v614
  %v616 = vmul.f32 %v349, %v615
  %v618 = vsel %vm448, %v616, 0
  %620 = vmatprep.subr.mxu0 0.0
  %621 = vmatpush1.msra.mxu0 0.0
  %622 = vmatprep.subr.mxu0 0.0
  %623 = vmatpush1.msra.mxu0 0.0
  %624 = vmatprep.subr.mxu0 0.0
  %625 = vmatpush1.msra.mxu0 0.0
  %626 = vmatprep.subr.mxu0 0.0
  %627 = vmatpush1.msra.mxu0 0.0
  %628 = vmatprep.subr.mxu0 0.0
  %629 = vmatpush1.msra.mxu0 0.0
  %630 = vmatprep.subr.mxu0 0.0
  %631 = vmatpush1.msra.mxu0 0.0
  %632 = vmatprep.subr.mxu0 0.0
  %633 = vmatpush1.msra.mxu0 0.0
  %634 = vmatprep.subr.mxu0 0.0
  %635 = vmatpush1.msra.mxu0 0.0
  %636 = vmatprep.subr.mxu0 0.0
  %637 = vmatpush1.msra.mxu0 0.0
  %638 = vmatprep.subr.mxu0 0.0
  %639 = vmatpush1.msra.mxu0 0.0
  %640 = vmatprep.subr.mxu0 0.0
  %641 = vmatpush1.msra.mxu0 0.0
  %642 = vmatprep.subr.mxu0 0.0
  %643 = vmatpush1.msra.mxu0 0.0
  %644 = vmatprep.subr.mxu0 0.0
  %645 = vmatpush1.msra.mxu0 0.0
  %646 = vmatprep.subr.mxu0 0.0
  %647 = vmatpush1.msra.mxu0 0.0
  %648 = vmatprep.subr.mxu0 0.0
  %649 = vmatpush1.msra.mxu0 0.0
  %650 = vmatprep.subr.mxu0 0.0
  %651 = vmatpush1.msra.mxu0 %v367
  %652 = vmatprep.subr.mxu0 0.0
  %653 = vmatpush2.msra.mxu0 0.0
  %654 = vmatprep.subr.mxu0 0.0
  %655 = vmatpush2.msra.mxu0 0.0
  %656 = vmatprep.subr.mxu0 0.0
  %657 = vmatpush2.msra.mxu0 0.0
  %658 = vmatprep.subr.mxu0 0.0
  %659 = vmatpush2.msra.mxu0 0.0
  %660 = vmatprep.subr.mxu0 0.0
  %661 = vmatpush2.msra.mxu0 0.0
  %662 = vmatprep.subr.mxu0 0.0
  %663 = vmatpush2.msra.mxu0 0.0
  %664 = vmatprep.subr.mxu0 0.0
  %665 = vmatpush2.msra.mxu0 0.0
  %666 = vmatprep.subr.mxu0 0.0
  %667 = vmatpush2.msra.mxu0 0.0
  %668 = vmatprep.subr.mxu0 0.0
  %669 = vmatpush2.msra.mxu0 0.0
  %670 = vmatprep.subr.mxu0 0.0
  %671 = vmatpush2.msra.mxu0 0.0
  %672 = vmatprep.subr.mxu0 0.0
  %673 = vmatpush2.msra.mxu0 0.0
  %674 = vmatprep.subr.mxu0 0.0
  %675 = vmatpush2.msra.mxu0 0.0
  %676 = vmatprep.subr.mxu0 0.0
  %677 = vmatpush2.msra.mxu0 0.0
  %678 = vmatprep.subr.mxu0 0.0
  %679 = vmatpush2.msra.mxu0 0.0
  %680 = vmatprep.subr.mxu0 0.0
  %681 = vmatpush2.msra.mxu0 0.0
  %682 = vmatprep.subr.mxu0 0.0
  %683 = vmatpush2.msra.mxu0 0.0
  %684 = vmatprep.mubr.f32.mxu0 0.0
  %685 = vmatmul.mubr.f32.gmra.mxu0 %v618
  %v686 = vpop.f32.mrf.mxu0
  %v687 = vadd.f32 0.0, %v686
  %v688 = vpop.f32.mrf.mxu0
  %689 = vdwg.mxu0
  %v690 = vlaneseq
  %v691 = vshrl.u32 %v690, 7
  %v692 = vsub.s32 0, %v691
  %v693 = vrot.slane %v687, %v692
  %v694 = vmul.f32 %v526, %v693
  %v695 = vmul.f32 %v527, %v693
  %v696 = vmul.f32 %v528, %v693
  %v697 = vmul.f32 %v529, %v693
  %v699 = vlaneseq
  %v700 = vshrl.u32 %v699, 7
  %v701 = vsub.s32 0, %v700
  %v702 = vrot.slane %v350, %v701
  %v704 = vadd.f32 %v694, %v702
  %v705 = vadd.f32 %v695, %v702
  %v706 = vadd.f32 %v696, %v702
  %v707 = vadd.f32 %v697, %v702
  %v708 = vmax.f32 %v704, 0.0
  %v709 = vmax.f32 %v705, 0.0
  %v710 = vmax.f32 %v706, 0.0
  %v711 = vmax.f32 %v707, 0.0
  %v712 = vpack.c.bf16 %v709, %v708
  %v713 = vpack.c.bf16 %v711, %v710
  %v715 = vshrl.u32 %v712, 16
  %v717 = vrot.slane %v715, 7
  %v718 = vshll.u32 %v712, 16
  %v720 = vor.u32 %v717, %v718
  %v723 = vshrl.u32 %v713, 16
  %v725 = vrot.slane %v723, 7
  %v726 = vshll.u32 %v713, 16
  %v728 = vor.u32 %v725, %v726
  %v730 = vsel %vm71, 0, %v720
  %v731 = vsel %vm71, 0, %v728
  %v732 = vrot.slane %v718, 1
  %v733 = vor.u32 %v715, %v732
  %v735 = vrot.slane %v726, 1
  %v736 = vor.u32 %v723, %v735
  %v738 = vsel %vm82, %v733, 0
  %v739 = vsel %vm82, %v736, 0
  %v740 = vld [vmem:[%s2] sm:$0xf]
  %v741 = vld [vmem:[%s2 + $0x4] sm:$0xf]
  %v742 = vld [vmem:[%s2 + $0x8] sm:$0xf]
  %v743 = vld [vmem:[%s2 + $0xc] sm:$0xf]
  %v744 = vld [vmem:[%s2 + $0x10] sm:$0xf]
  %v745 = vld [vmem:[%s2 + $0x14] sm:$0xf]
  %v746 = vld [vmem:[%s2 + $0x18] sm:$0xf]
  %v747 = vld [vmem:[%s2 + $0x1c] sm:$0xf]
  %v748 = vld [vmem:[%s2 + $0x20] sm:$0xf]
  %v749 = vld [vmem:[%s2 + $0x24] sm:$0xf]
  %v750 = vld [vmem:[%s2 + $0x28] sm:$0xf]
  %v751 = vld [vmem:[%s2 + $0x2c] sm:$0xf]
  %v752 = vld [vmem:[%s2 + $0x30] sm:$0xf]
  %v753 = vld [vmem:[%s2 + $0x34] sm:$0xf]
  %v754 = vld [vmem:[%s2 + $0x38] sm:$0xf]
  %v755 = vld [vmem:[%s2 + $0x3c] sm:$0xf]
  %v756 = vld [vmem:[%s2 + $0x40] sm:$0xf]
  %v757 = vld [vmem:[%s2 + $0x44] sm:$0xf]
  %v758 = vld [vmem:[%s2 + $0x48] sm:$0xf]
  %v759 = vld [vmem:[%s2 + $0x4c] sm:$0xf]
  %v760 = vld [vmem:[%s2 + $0x50] sm:$0xf]
  %v761 = vld [vmem:[%s2 + $0x54] sm:$0xf]
  %v762 = vld [vmem:[%s2 + $0x58] sm:$0xf]
  %v763 = vld [vmem:[%s2 + $0x5c] sm:$0xf]
  %v764 = vld [vmem:[%s2 + $0x60] sm:$0xf]
  %v765 = vld [vmem:[%s2 + $0x64] sm:$0xf]
  %v766 = vld [vmem:[%s2 + $0x68] sm:$0xf]
  %v767 = vld [vmem:[%s2 + $0x6c] sm:$0xf]
  %v768 = vld [vmem:[%s2 + $0x70] sm:$0xf]
  %v769 = vld [vmem:[%s2 + $0x74] sm:$0xf]
  %v770 = vld [vmem:[%s2 + $0x78] sm:$0xf]
  %v771 = vld [vmem:[%s2 + $0x7c] sm:$0xf]
  %v788 = vunpack.c.l.b16 %v756
  %v789 = vunpack.c.l.b16 %v757
  %v790 = vunpack.c.l.b16 %v758
  %v791 = vunpack.c.l.b16 %v759
  %v792 = vunpack.c.l.b16 %v760
  %v793 = vunpack.c.l.b16 %v761
  %v794 = vunpack.c.l.b16 %v762
  %v795 = vunpack.c.l.b16 %v763
  %v796 = vunpack.c.l.b16 %v764
  %v797 = vunpack.c.l.b16 %v765
  %v798 = vunpack.c.l.b16 %v766
  %v799 = vunpack.c.l.b16 %v767
  %v800 = vunpack.c.l.b16 %v768
  %v801 = vunpack.c.l.b16 %v769
  %v802 = vunpack.c.l.b16 %v770
  %v803 = vunpack.c.l.b16 %v771
  %v804 = vpack.c.b16 %v789, %v788
  %v805 = vpack.c.b16 %v791, %v790
  %v806 = vpack.c.b16 %v793, %v792
  %v807 = vpack.c.b16 %v795, %v794
  %v808 = vpack.c.b16 %v797, %v796
  %v809 = vpack.c.b16 %v799, %v798
  %v810 = vpack.c.b16 %v801, %v800
  %v811 = vpack.c.b16 %v803, %v802
  %820 = vmatprep.subr.bf16.mxu0 0
  %821 = vmatpush1.bf16.msra.mxu0 %v811
  %822 = vmatprep.subr.bf16.mxu0 0
  %823 = vmatpush1.bf16.msra.mxu0 %v810
  %824 = vmatprep.subr.bf16.mxu0 0
  %825 = vmatpush1.bf16.msra.mxu0 %v809
  %826 = vmatprep.subr.bf16.mxu0 0
  %827 = vmatpush1.bf16.msra.mxu0 %v808
  %828 = vmatprep.subr.bf16.mxu0 0
  %829 = vmatpush1.bf16.msra.mxu0 %v807
  %830 = vmatprep.subr.bf16.mxu0 0
  %831 = vmatpush1.bf16.msra.mxu0 %v806
  %832 = vmatprep.subr.bf16.mxu0 0
  %833 = vmatpush1.bf16.msra.mxu0 %v805
  %834 = vmatprep.subr.bf16.mxu0 0
  %835 = vmatpush1.bf16.msra.mxu0 %v804
  %836 = vmatprep.subr.bf16.mxu0 0
  %837 = vmatpush2.bf16.msra.mxu0 0
  %838 = vmatprep.subr.bf16.mxu0 0
  %839 = vmatpush2.bf16.msra.mxu0 0
  %840 = vmatprep.subr.bf16.mxu0 0
  %841 = vmatpush2.bf16.msra.mxu0 0
  %842 = vmatprep.subr.bf16.mxu0 0
  %843 = vmatpush2.bf16.msra.mxu0 0
  %844 = vmatprep.subr.bf16.mxu0 0
  %845 = vmatpush2.bf16.msra.mxu0 0
  %846 = vmatprep.subr.bf16.mxu0 0
  %847 = vmatpush2.bf16.msra.mxu0 0
  %848 = vmatprep.subr.bf16.mxu0 0
  %849 = vmatpush2.bf16.msra.mxu0 0
  %850 = vmatprep.subr.bf16.mxu0 0
  %851 = vmatpush2.bf16.msra.mxu0 0
  %852 = vmatprep.mubr.bf16.mxu0 0
  %853 = vmatmul.mubr.bf16.gmra.mxu0 %v712
  %v854 = vpop.f32.mrf.mxu0
  %v855 = vadd.f32 0.0, %v854
  %v856 = vpop.f32.mrf.mxu0
  %v857 = vpop.f32.mrf.mxu0
  %v858 = vadd.f32 0.0, %v857
  %v859 = vpop.f32.mrf.mxu0
  %860 = vmatprep.mubr.bf16.mxu0 0
  %861 = vmatmul.mubr.bf16.gmra.mxu0 %v713
  %v862 = vpop.f32.mrf.mxu0
  %v863 = vadd.f32 0.0, %v862
  %v864 = vpop.f32.mrf.mxu0
  %v865 = vpop.f32.mrf.mxu0
  %v866 = vadd.f32 0.0, %v865
  %v867 = vpop.f32.mrf.mxu0
  %868 = vdwg.mxu0
  %v885 = vunpack.c.l.b16 %v740
  %v886 = vunpack.c.l.b16 %v741
  %v887 = vunpack.c.l.b16 %v742
  %v888 = vunpack.c.l.b16 %v743
  %v889 = vunpack.c.l.b16 %v744
  %v890 = vunpack.c.l.b16 %v745
  %v891 = vunpack.c.l.b16 %v746
  %v892 = vunpack.c.l.b16 %v747
  %v893 = vunpack.c.l.b16 %v748
  %v894 = vunpack.c.l.b16 %v749
  %v895 = vunpack.c.l.b16 %v750
  %v896 = vunpack.c.l.b16 %v751
  %v897 = vunpack.c.l.b16 %v752
  %v898 = vunpack.c.l.b16 %v753
  %v899 = vunpack.c.l.b16 %v754
  %v900 = vunpack.c.l.b16 %v755
  %v901 = vpack.c.b16 %v886, %v885
  %v902 = vpack.c.b16 %v888, %v887
  %v903 = vpack.c.b16 %v890, %v889
  %v904 = vpack.c.b16 %v892, %v891
  %v905 = vpack.c.b16 %v894, %v893
  %v906 = vpack.c.b16 %v896, %v895
  %v907 = vpack.c.b16 %v898, %v897
  %v908 = vpack.c.b16 %v900, %v899
  %917 = vmatprep.subr.bf16.mxu0 0
  %918 = vmatpush1.bf16.msra.mxu0 %v908
  %919 = vmatprep.subr.bf16.mxu0 0
  %920 = vmatpush1.bf16.msra.mxu0 %v907
  %921 = vmatprep.subr.bf16.mxu0 0
  %922 = vmatpush1.bf16.msra.mxu0 %v906
  %923 = vmatprep.subr.bf16.mxu0 0
  %924 = vmatpush1.bf16.msra.mxu0 %v905
  %925 = vmatprep.subr.bf16.mxu0 0
  %926 = vmatpush1.bf16.msra.mxu0 %v904
  %927 = vmatprep.subr.bf16.mxu0 0
  %928 = vmatpush1.bf16.msra.mxu0 %v903
  %929 = vmatprep.subr.bf16.mxu0 0
  %930 = vmatpush1.bf16.msra.mxu0 %v902
  %931 = vmatprep.subr.bf16.mxu0 0
  %932 = vmatpush1.bf16.msra.mxu0 %v901
  %933 = vmatprep.subr.bf16.mxu0 0
  %934 = vmatpush2.bf16.msra.mxu0 0
  %935 = vmatprep.subr.bf16.mxu0 0
  %936 = vmatpush2.bf16.msra.mxu0 0
  %937 = vmatprep.subr.bf16.mxu0 0
  %938 = vmatpush2.bf16.msra.mxu0 0
  %939 = vmatprep.subr.bf16.mxu0 0
  %940 = vmatpush2.bf16.msra.mxu0 0
  %941 = vmatprep.subr.bf16.mxu0 0
  %942 = vmatpush2.bf16.msra.mxu0 0
  %943 = vmatprep.subr.bf16.mxu0 0
  %944 = vmatpush2.bf16.msra.mxu0 0
  %945 = vmatprep.subr.bf16.mxu0 0
  %946 = vmatpush2.bf16.msra.mxu0 0
  %947 = vmatprep.subr.bf16.mxu0 0
  %948 = vmatpush2.bf16.msra.mxu0 0
  %949 = vmatprep.mubr.bf16.mxu0 0
  %950 = vmatmul.mubr.bf16.gmra.mxu0 %v730
  %v951 = vpop.f32.mrf.mxu0
  %v952 = vadd.f32 %v855, %v951
  %v953 = vpop.f32.mrf.mxu0
  %v954 = vpop.f32.mrf.mxu0
  %v955 = vadd.f32 %v858, %v954
  %v956 = vpop.f32.mrf.mxu0
  %957 = vmatprep.mubr.bf16.mxu0 0
  %958 = vmatmul.mubr.bf16.gmra.mxu0 %v731
  %v959 = vpop.f32.mrf.mxu0
  %v960 = vadd.f32 %v863, %v959
  %v961 = vpop.f32.mrf.mxu0
  %v962 = vpop.f32.mrf.mxu0
  %v963 = vadd.f32 %v866, %v962
  %v964 = vpop.f32.mrf.mxu0
  %965 = vdwg.mxu0
  %v966 = vld [vmem:[%s2 + $0x80] sm:$0xf]
  %v967 = vld [vmem:[%s2 + $0x84] sm:$0xf]
  %v968 = vld [vmem:[%s2 + $0x88] sm:$0xf]
  %v969 = vld [vmem:[%s2 + $0x8c] sm:$0xf]
  %v970 = vld [vmem:[%s2 + $0x90] sm:$0xf]
  %v971 = vld [vmem:[%s2 + $0x94] sm:$0xf]
  %v972 = vld [vmem:[%s2 + $0x98] sm:$0xf]
  %v973 = vld [vmem:[%s2 + $0x9c] sm:$0xf]
  %v974 = vld [vmem:[%s2 + $0xa0] sm:$0xf]
  %v975 = vld [vmem:[%s2 + $0xa4] sm:$0xf]
  %v976 = vld [vmem:[%s2 + $0xa8] sm:$0xf]
  %v977 = vld [vmem:[%s2 + $0xac] sm:$0xf]
  %v978 = vld [vmem:[%s2 + $0xb0] sm:$0xf]
  %v979 = vld [vmem:[%s2 + $0xb4] sm:$0xf]
  %v980 = vld [vmem:[%s2 + $0xb8] sm:$0xf]
  %v981 = vld [vmem:[%s2 + $0xbc] sm:$0xf]
  %v998 = vunpack.c.l.b16 %v966
  %v999 = vunpack.c.l.b16 %v967
  %v1000 = vunpack.c.l.b16 %v968
  %v1001 = vunpack.c.l.b16 %v969
  %v1002 = vunpack.c.l.b16 %v970
  %v1003 = vunpack.c.l.b16 %v971
  %v1004 = vunpack.c.l.b16 %v972
  %v1005 = vunpack.c.l.b16 %v973
  %v1006 = vunpack.c.l.b16 %v974
  %v1007 = vunpack.c.l.b16 %v975
  %v1008 = vunpack.c.l.b16 %v976
  %v1009 = vunpack.c.l.b16 %v977
  %v1010 = vunpack.c.l.b16 %v978
  %v1011 = vunpack.c.l.b16 %v979
  %v1012 = vunpack.c.l.b16 %v980
  %v1013 = vunpack.c.l.b16 %v981
  %v1014 = vpack.c.b16 %v999, %v998
  %v1015 = vpack.c.b16 %v1001, %v1000
  %v1016 = vpack.c.b16 %v1003, %v1002
  %v1017 = vpack.c.b16 %v1005, %v1004
  %v1018 = vpack.c.b16 %v1007, %v1006
  %v1019 = vpack.c.b16 %v1009, %v1008
  %v1020 = vpack.c.b16 %v1011, %v1010
  %v1021 = vpack.c.b16 %v1013, %v1012
  %1030 = vmatprep.subr.bf16.mxu0 0
  %1031 = vmatpush1.bf16.msra.mxu0 %v1021
  %1032 = vmatprep.subr.bf16.mxu0 0
  %1033 = vmatpush1.bf16.msra.mxu0 %v1020
  %1034 = vmatprep.subr.bf16.mxu0 0
  %1035 = vmatpush1.bf16.msra.mxu0 %v1019
  %1036 = vmatprep.subr.bf16.mxu0 0
  %1037 = vmatpush1.bf16.msra.mxu0 %v1018
  %1038 = vmatprep.subr.bf16.mxu0 0
  %1039 = vmatpush1.bf16.msra.mxu0 %v1017
  %1040 = vmatprep.subr.bf16.mxu0 0
  %1041 = vmatpush1.bf16.msra.mxu0 %v1016
  %1042 = vmatprep.subr.bf16.mxu0 0
  %1043 = vmatpush1.bf16.msra.mxu0 %v1015
  %1044 = vmatprep.subr.bf16.mxu0 0
  %1045 = vmatpush1.bf16.msra.mxu0 %v1014
  %1046 = vmatprep.subr.bf16.mxu0 0
  %1047 = vmatpush2.bf16.msra.mxu0 0
  %1048 = vmatprep.subr.bf16.mxu0 0
  %1049 = vmatpush2.bf16.msra.mxu0 0
  %1050 = vmatprep.subr.bf16.mxu0 0
  %1051 = vmatpush2.bf16.msra.mxu0 0
  %1052 = vmatprep.subr.bf16.mxu0 0
  %1053 = vmatpush2.bf16.msra.mxu0 0
  %1054 = vmatprep.subr.bf16.mxu0 0
  %1055 = vmatpush2.bf16.msra.mxu0 0
  %1056 = vmatprep.subr.bf16.mxu0 0
  %1057 = vmatpush2.bf16.msra.mxu0 0
  %1058 = vmatprep.subr.bf16.mxu0 0
  %1059 = vmatpush2.bf16.msra.mxu0 0
  %1060 = vmatprep.subr.bf16.mxu0 0
  %1061 = vmatpush2.bf16.msra.mxu0 0
  %1062 = vmatprep.mubr.bf16.mxu0 0
  %1063 = vmatmul.mubr.bf16.gmra.mxu0 %v738
  %v1064 = vpop.f32.mrf.mxu0
  %v1065 = vadd.f32 0.0, %v1064
  %v1066 = vpop.f32.mrf.mxu0
  %v1067 = vpop.f32.mrf.mxu0
  %v1068 = vadd.f32 0.0, %v1067
  %v1069 = vpop.f32.mrf.mxu0
  %1070 = vmatprep.mubr.bf16.mxu0 0
  %1071 = vmatmul.mubr.bf16.gmra.mxu0 %v739
  %v1072 = vpop.f32.mrf.mxu0
  %v1073 = vadd.f32 0.0, %v1072
  %v1074 = vpop.f32.mrf.mxu0
  %v1075 = vpop.f32.mrf.mxu0
  %v1076 = vadd.f32 0.0, %v1075
  %v1077 = vpop.f32.mrf.mxu0
  %1078 = vdwg.mxu0
  %v1079 = vadd.f32 %v952, %v1065
  %v1080 = vadd.f32 %v955, %v1068
  %v1081 = vadd.f32 %v960, %v1073
  %v1082 = vadd.f32 %v963, %v1076
  %v1083 = vld [vmem:[%s5] sm:$0x1]
  %v1084 = vld [vmem:[%s6] sm:$0x1]
  %v1085 = vld [vmem:[%s9] sm:$0xff]
  %v1086 = vld [vmem:[%s9 + $0x8] sm:$0xff]
  %v1087 = vld [vmem:[%s9 + $0x10] sm:$0xff]
  %v1088 = vld [vmem:[%s9 + $0x18] sm:$0xff]
  %v1089 = vld [vmem:[%s9 + $0x20] sm:$0xff]
  %v1090 = vld [vmem:[%s9 + $0x28] sm:$0xff]
  %v1091 = vld [vmem:[%s9 + $0x30] sm:$0xff]
  %v1092 = vld [vmem:[%s9 + $0x38] sm:$0xff]
  %v1093 = vld [vmem:[%s9 + $0x40] sm:$0xff]
  %v1094 = vld [vmem:[%s9 + $0x48] sm:$0xff]
  %v1095 = vld [vmem:[%s9 + $0x50] sm:$0xff]
  %v1096 = vld [vmem:[%s9 + $0x58] sm:$0xff]
  %v1097 = vld [vmem:[%s9 + $0x60] sm:$0xff]
  %v1098 = vld [vmem:[%s9 + $0x68] sm:$0xff]
  %v1099 = vld [vmem:[%s9 + $0x70] sm:$0xff]
  %v1100 = vld [vmem:[%s9 + $0x78] sm:$0xff]
  %v1101 = vld [vmem:[%s10] sm:$0xff]
  %v1102 = vadd.f32 %v1079, %v1080
  %v1103 = vadd.f32 %v1102, %v1081
  %v1104 = vadd.f32 %v1103, %v1082
  %v1105 = vrot.slane %v1104, 4
  %v1106 = vadd.f32 %v1104, %v1105
  %v1107 = vrot.slane %v1106, 2
  %v1108 = vadd.f32 %v1106, %v1107
  %v1109 = vrot.slane %v1108, 1
  %v1110 = vadd.f32 %v1108, %v1109
  %1111 = vmatprep.subr.mxu0 0.0
  %1112 = vmatpush1.msra.mxu0 %v1100
  %1113 = vmatprep.subr.mxu0 0.0
  %1114 = vmatpush1.msra.mxu0 %v1099
  %1115 = vmatprep.subr.mxu0 0.0
  %1116 = vmatpush1.msra.mxu0 %v1098
  %1117 = vmatprep.subr.mxu0 0.0
  %1118 = vmatpush1.msra.mxu0 %v1097
  %1119 = vmatprep.subr.mxu0 0.0
  %1120 = vmatpush1.msra.mxu0 %v1096
  %1121 = vmatprep.subr.mxu0 0.0
  %1122 = vmatpush1.msra.mxu0 %v1095
  %1123 = vmatprep.subr.mxu0 0.0
  %1124 = vmatpush1.msra.mxu0 %v1094
  %1125 = vmatprep.subr.mxu0 0.0
  %1126 = vmatpush1.msra.mxu0 %v1093
  %1127 = vmatprep.subr.mxu0 0.0
  %1128 = vmatpush1.msra.mxu0 %v1092
  %1129 = vmatprep.subr.mxu0 0.0
  %1130 = vmatpush1.msra.mxu0 %v1091
  %1131 = vmatprep.subr.mxu0 0.0
  %1132 = vmatpush1.msra.mxu0 %v1090
  %1133 = vmatprep.subr.mxu0 0.0
  %1134 = vmatpush1.msra.mxu0 %v1089
  %1135 = vmatprep.subr.mxu0 0.0
  %1136 = vmatpush1.msra.mxu0 %v1088
  %1137 = vmatprep.subr.mxu0 0.0
  %1138 = vmatpush1.msra.mxu0 %v1087
  %1139 = vmatprep.subr.mxu0 0.0
  %1140 = vmatpush1.msra.mxu0 %v1086
  %1141 = vmatprep.subr.mxu0 0.0
  %1142 = vmatpush1.msra.mxu0 %v1085
  %1143 = vmatprep.subr.mxu0 0.0
  %1144 = vmatpush2.msra.mxu0 0.0
  %1145 = vmatprep.subr.mxu0 0.0
  %1146 = vmatpush2.msra.mxu0 0.0
  %1147 = vmatprep.subr.mxu0 0.0
  %1148 = vmatpush2.msra.mxu0 0.0
  %1149 = vmatprep.subr.mxu0 0.0
  %1150 = vmatpush2.msra.mxu0 0.0
  %1151 = vmatprep.subr.mxu0 0.0
  %1152 = vmatpush2.msra.mxu0 0.0
  %1153 = vmatprep.subr.mxu0 0.0
  %1154 = vmatpush2.msra.mxu0 0.0
  %1155 = vmatprep.subr.mxu0 0.0
  %1156 = vmatpush2.msra.mxu0 0.0
  %1157 = vmatprep.subr.mxu0 0.0
  %1158 = vmatpush2.msra.mxu0 0.0
  %1159 = vmatprep.subr.mxu0 0.0
  %1160 = vmatpush2.msra.mxu0 0.0
  %1161 = vmatprep.subr.mxu0 0.0
  %1162 = vmatpush2.msra.mxu0 0.0
  %1163 = vmatprep.subr.mxu0 0.0
  %1164 = vmatpush2.msra.mxu0 0.0
  %1165 = vmatprep.subr.mxu0 0.0
  %1166 = vmatpush2.msra.mxu0 0.0
  %1167 = vmatprep.subr.mxu0 0.0
  %1168 = vmatpush2.msra.mxu0 0.0
  %1169 = vmatprep.subr.mxu0 0.0
  %1170 = vmatpush2.msra.mxu0 0.0
  %1171 = vmatprep.subr.mxu0 0.0
  %1172 = vmatpush2.msra.mxu0 0.0
  %1173 = vmatprep.subr.mxu0 0.0
  %1174 = vmatpush2.msra.mxu0 0.0
  %1175 = vmatprep.mubr.f32.mxu0 0.0
  %1176 = vmatmul.mubr.f32.gmra.mxu0 %v1110
  %v1177 = vpop.f32.mrf.mxu0
  %v1178 = vadd.f32 0.0, %v1177
  %v1179 = vpop.f32.mrf.mxu0
  %1180 = vdwg.mxu0
  %v1181 = vmul.f32 %v1178, 0.001953125
  %v1183 = vsel %vm448, %v1181, 0
  %1185 = vmatprep.subr.mxu0 0.0
  %1186 = vmatpush1.msra.mxu0 0.0
  %1187 = vmatprep.subr.mxu0 0.0
  %1188 = vmatpush1.msra.mxu0 0.0
  %1189 = vmatprep.subr.mxu0 0.0
  %1190 = vmatpush1.msra.mxu0 0.0
  %1191 = vmatprep.subr.mxu0 0.0
  %1192 = vmatpush1.msra.mxu0 0.0
  %1193 = vmatprep.subr.mxu0 0.0
  %1194 = vmatpush1.msra.mxu0 0.0
  %1195 = vmatprep.subr.mxu0 0.0
  %1196 = vmatpush1.msra.mxu0 0.0
  %1197 = vmatprep.subr.mxu0 0.0
  %1198 = vmatpush1.msra.mxu0 0.0
  %1199 = vmatprep.subr.mxu0 0.0
  %1200 = vmatpush1.msra.mxu0 0.0
  %1201 = vmatprep.subr.mxu0 0.0
  %1202 = vmatpush1.msra.mxu0 0.0
  %1203 = vmatprep.subr.mxu0 0.0
  %1204 = vmatpush1.msra.mxu0 0.0
  %1205 = vmatprep.subr.mxu0 0.0
  %1206 = vmatpush1.msra.mxu0 0.0
  %1207 = vmatprep.subr.mxu0 0.0
  %1208 = vmatpush1.msra.mxu0 0.0
  %1209 = vmatprep.subr.mxu0 0.0
  %1210 = vmatpush1.msra.mxu0 0.0
  %1211 = vmatprep.subr.mxu0 0.0
  %1212 = vmatpush1.msra.mxu0 0.0
  %1213 = vmatprep.subr.mxu0 0.0
  %1214 = vmatpush1.msra.mxu0 0.0
  %1215 = vmatprep.subr.mxu0 0.0
  %1216 = vmatpush1.msra.mxu0 %v1101
  %1217 = vmatprep.subr.mxu0 0.0
  %1218 = vmatpush2.msra.mxu0 0.0
  %1219 = vmatprep.subr.mxu0 0.0
  %1220 = vmatpush2.msra.mxu0 0.0
  %1221 = vmatprep.subr.mxu0 0.0
  %1222 = vmatpush2.msra.mxu0 0.0
  %1223 = vmatprep.subr.mxu0 0.0
  %1224 = vmatpush2.msra.mxu0 0.0
  %1225 = vmatprep.subr.mxu0 0.0
  %1226 = vmatpush2.msra.mxu0 0.0
  %1227 = vmatprep.subr.mxu0 0.0
  %1228 = vmatpush2.msra.mxu0 0.0
  %1229 = vmatprep.subr.mxu0 0.0
  %1230 = vmatpush2.msra.mxu0 0.0
  %1231 = vmatprep.subr.mxu0 0.0
  %1232 = vmatpush2.msra.mxu0 0.0
  %1233 = vmatprep.subr.mxu0 0.0
  %1234 = vmatpush2.msra.mxu0 0.0
  %1235 = vmatprep.subr.mxu0 0.0
  %1236 = vmatpush2.msra.mxu0 0.0
  %1237 = vmatprep.subr.mxu0 0.0
  %1238 = vmatpush2.msra.mxu0 0.0
  %1239 = vmatprep.subr.mxu0 0.0
  %1240 = vmatpush2.msra.mxu0 0.0
  %1241 = vmatprep.subr.mxu0 0.0
  %1242 = vmatpush2.msra.mxu0 0.0
  %1243 = vmatprep.subr.mxu0 0.0
  %1244 = vmatpush2.msra.mxu0 0.0
  %1245 = vmatprep.subr.mxu0 0.0
  %1246 = vmatpush2.msra.mxu0 0.0
  %1247 = vmatprep.subr.mxu0 0.0
  %1248 = vmatpush2.msra.mxu0 0.0
  %1249 = vmatprep.mubr.f32.mxu0 0.0
  %1250 = vmatmul.mubr.f32.gmra.mxu0 %v1183
  %v1251 = vpop.f32.mrf.mxu0
  %v1252 = vadd.f32 0.0, %v1251
  %v1253 = vpop.f32.mrf.mxu0
  %1254 = vdwg.mxu0
  %v1255 = vlaneseq
  %v1256 = vshrl.u32 %v1255, 7
  %v1257 = vsub.s32 0, %v1256
  %v1258 = vrot.slane %v1252, %v1257
  %v1259 = vsub.f32 %v1079, %v1258
  %v1260 = vsub.f32 %v1080, %v1258
  %v1261 = vsub.f32 %v1081, %v1258
  %v1262 = vsub.f32 %v1082, %v1258
  %v1263 = vmul.f32 %v1259, %v1259
  %v1264 = vmul.f32 %v1260, %v1260
  %v1265 = vmul.f32 %v1261, %v1261
  %v1266 = vmul.f32 %v1262, %v1262
  %v1267 = vadd.f32 %v1263, %v1264
  %v1268 = vadd.f32 %v1267, %v1265
  %v1269 = vadd.f32 %v1268, %v1266
  %v1270 = vrot.slane %v1269, 4
  %v1271 = vadd.f32 %v1269, %v1270
  %v1272 = vrot.slane %v1271, 2
  %v1273 = vadd.f32 %v1271, %v1272
  %v1274 = vrot.slane %v1273, 1
  %v1275 = vadd.f32 %v1273, %v1274
  %1276 = vmatprep.subr.mxu0 0.0
  %1277 = vmatpush1.msra.mxu0 %v1100
  %1278 = vmatprep.subr.mxu0 0.0
  %1279 = vmatpush1.msra.mxu0 %v1099
  %1280 = vmatprep.subr.mxu0 0.0
  %1281 = vmatpush1.msra.mxu0 %v1098
  %1282 = vmatprep.subr.mxu0 0.0
  %1283 = vmatpush1.msra.mxu0 %v1097
  %1284 = vmatprep.subr.mxu0 0.0
  %1285 = vmatpush1.msra.mxu0 %v1096
  %1286 = vmatprep.subr.mxu0 0.0
  %1287 = vmatpush1.msra.mxu0 %v1095
  %1288 = vmatprep.subr.mxu0 0.0
  %1289 = vmatpush1.msra.mxu0 %v1094
  %1290 = vmatprep.subr.mxu0 0.0
  %1291 = vmatpush1.msra.mxu0 %v1093
  %1292 = vmatprep.subr.mxu0 0.0
  %1293 = vmatpush1.msra.mxu0 %v1092
  %1294 = vmatprep.subr.mxu0 0.0
  %1295 = vmatpush1.msra.mxu0 %v1091
  %1296 = vmatprep.subr.mxu0 0.0
  %1297 = vmatpush1.msra.mxu0 %v1090
  %1298 = vmatprep.subr.mxu0 0.0
  %1299 = vmatpush1.msra.mxu0 %v1089
  %1300 = vmatprep.subr.mxu0 0.0
  %1301 = vmatpush1.msra.mxu0 %v1088
  %1302 = vmatprep.subr.mxu0 0.0
  %1303 = vmatpush1.msra.mxu0 %v1087
  %1304 = vmatprep.subr.mxu0 0.0
  %1305 = vmatpush1.msra.mxu0 %v1086
  %1306 = vmatprep.subr.mxu0 0.0
  %1307 = vmatpush1.msra.mxu0 %v1085
  %1308 = vmatprep.subr.mxu0 0.0
  %1309 = vmatpush2.msra.mxu0 0.0
  %1310 = vmatprep.subr.mxu0 0.0
  %1311 = vmatpush2.msra.mxu0 0.0
  %1312 = vmatprep.subr.mxu0 0.0
  %1313 = vmatpush2.msra.mxu0 0.0
  %1314 = vmatprep.subr.mxu0 0.0
  %1315 = vmatpush2.msra.mxu0 0.0
  %1316 = vmatprep.subr.mxu0 0.0
  %1317 = vmatpush2.msra.mxu0 0.0
  %1318 = vmatprep.subr.mxu0 0.0
  %1319 = vmatpush2.msra.mxu0 0.0
  %1320 = vmatprep.subr.mxu0 0.0
  %1321 = vmatpush2.msra.mxu0 0.0
  %1322 = vmatprep.subr.mxu0 0.0
  %1323 = vmatpush2.msra.mxu0 0.0
  %1324 = vmatprep.subr.mxu0 0.0
  %1325 = vmatpush2.msra.mxu0 0.0
  %1326 = vmatprep.subr.mxu0 0.0
  %1327 = vmatpush2.msra.mxu0 0.0
  %1328 = vmatprep.subr.mxu0 0.0
  %1329 = vmatpush2.msra.mxu0 0.0
  %1330 = vmatprep.subr.mxu0 0.0
  %1331 = vmatpush2.msra.mxu0 0.0
  %1332 = vmatprep.subr.mxu0 0.0
  %1333 = vmatpush2.msra.mxu0 0.0
  %1334 = vmatprep.subr.mxu0 0.0
  %1335 = vmatpush2.msra.mxu0 0.0
  %1336 = vmatprep.subr.mxu0 0.0
  %1337 = vmatpush2.msra.mxu0 0.0
  %1338 = vmatprep.subr.mxu0 0.0
  %1339 = vmatpush2.msra.mxu0 0.0
  %1340 = vmatprep.mubr.f32.mxu0 0.0
  %1341 = vmatmul.mubr.f32.gmra.mxu0 %v1275
  %v1342 = vpop.f32.mrf.mxu0
  %v1343 = vadd.f32 0.0, %v1342
  %v1344 = vpop.f32.mrf.mxu0
  %1345 = vdwg.mxu0
  %v1346 = vmul.f32 %v1343, 0.001953125
  %v1347 = vadd.f32 %v1346, 1e-05
  %v1348 = vrsqrt.pop %v1347
  %v1349 = vmul.f32 %v1083, %v1348
  %v1351 = vsel %vm448, %v1349, 0
  %1353 = vmatprep.subr.mxu0 0.0
  %1354 = vmatpush1.msra.mxu0 0.0
  %1355 = vmatprep.subr.mxu0 0.0
  %1356 = vmatpush1.msra.mxu0 0.0
  %1357 = vmatprep.subr.mxu0 0.0
  %1358 = vmatpush1.msra.mxu0 0.0
  %1359 = vmatprep.subr.mxu0 0.0
  %1360 = vmatpush1.msra.mxu0 0.0
  %1361 = vmatprep.subr.mxu0 0.0
  %1362 = vmatpush1.msra.mxu0 0.0
  %1363 = vmatprep.subr.mxu0 0.0
  %1364 = vmatpush1.msra.mxu0 0.0
  %1365 = vmatprep.subr.mxu0 0.0
  %1366 = vmatpush1.msra.mxu0 0.0
  %1367 = vmatprep.subr.mxu0 0.0
  %1368 = vmatpush1.msra.mxu0 0.0
  %1369 = vmatprep.subr.mxu0 0.0
  %1370 = vmatpush1.msra.mxu0 0.0
  %1371 = vmatprep.subr.mxu0 0.0
  %1372 = vmatpush1.msra.mxu0 0.0
  %1373 = vmatprep.subr.mxu0 0.0
  %1374 = vmatpush1.msra.mxu0 0.0
  %1375 = vmatprep.subr.mxu0 0.0
  %1376 = vmatpush1.msra.mxu0 0.0
  %1377 = vmatprep.subr.mxu0 0.0
  %1378 = vmatpush1.msra.mxu0 0.0
  %1379 = vmatprep.subr.mxu0 0.0
  %1380 = vmatpush1.msra.mxu0 0.0
  %1381 = vmatprep.subr.mxu0 0.0
  %1382 = vmatpush1.msra.mxu0 0.0
  %1383 = vmatprep.subr.mxu0 0.0
  %1384 = vmatpush1.msra.mxu0 %v1101
  %1385 = vmatprep.subr.mxu0 0.0
  %1386 = vmatpush2.msra.mxu0 0.0
  %1387 = vmatprep.subr.mxu0 0.0
  %1388 = vmatpush2.msra.mxu0 0.0
  %1389 = vmatprep.subr.mxu0 0.0
  %1390 = vmatpush2.msra.mxu0 0.0
  %1391 = vmatprep.subr.mxu0 0.0
  %1392 = vmatpush2.msra.mxu0 0.0
  %1393 = vmatprep.subr.mxu0 0.0
  %1394 = vmatpush2.msra.mxu0 0.0
  %1395 = vmatprep.subr.mxu0 0.0
  %1396 = vmatpush2.msra.mxu0 0.0
  %1397 = vmatprep.subr.mxu0 0.0
  %1398 = vmatpush2.msra.mxu0 0.0
  %1399 = vmatprep.subr.mxu0 0.0
  %1400 = vmatpush2.msra.mxu0 0.0
  %1401 = vmatprep.subr.mxu0 0.0
  %1402 = vmatpush2.msra.mxu0 0.0
  %1403 = vmatprep.subr.mxu0 0.0
  %1404 = vmatpush2.msra.mxu0 0.0
  %1405 = vmatprep.subr.mxu0 0.0
  %1406 = vmatpush2.msra.mxu0 0.0
  %1407 = vmatprep.subr.mxu0 0.0
  %1408 = vmatpush2.msra.mxu0 0.0
  %1409 = vmatprep.subr.mxu0 0.0
  %1410 = vmatpush2.msra.mxu0 0.0
  %1411 = vmatprep.subr.mxu0 0.0
  %1412 = vmatpush2.msra.mxu0 0.0
  %1413 = vmatprep.subr.mxu0 0.0
  %1414 = vmatpush2.msra.mxu0 0.0
  %1415 = vmatprep.subr.mxu0 0.0
  %1416 = vmatpush2.msra.mxu0 0.0
  %1417 = vmatprep.mubr.f32.mxu0 0.0
  %1418 = vmatmul.mubr.f32.gmra.mxu0 %v1351
  %v1419 = vpop.f32.mrf.mxu0
  %v1420 = vadd.f32 0.0, %v1419
  %v1421 = vpop.f32.mrf.mxu0
  %1422 = vdwg.mxu0
  %v1423 = vlaneseq
  %v1424 = vshrl.u32 %v1423, 7
  %v1425 = vsub.s32 0, %v1424
  %v1426 = vrot.slane %v1420, %v1425
  %v1427 = vmul.f32 %v1259, %v1426
  %v1428 = vmul.f32 %v1260, %v1426
  %v1429 = vmul.f32 %v1261, %v1426
  %v1430 = vmul.f32 %v1262, %v1426
  %v1432 = vlaneseq
  %v1433 = vshrl.u32 %v1432, 7
  %v1434 = vsub.s32 0, %v1433
  %v1435 = vrot.slane %v1084, %v1434
  %v1437 = vadd.f32 %v1427, %v1435
  %v1438 = vadd.f32 %v1428, %v1435
  %v1439 = vadd.f32 %v1429, %v1435
  %v1440 = vadd.f32 %v1430, %v1435
  %v1441 = vmax.f32 %v1437, 0.0
  %v1442 = vmax.f32 %v1438, 0.0
  %v1443 = vmax.f32 %v1439, 0.0
  %v1444 = vmax.f32 %v1440, 0.0
  %1445 = vst [vmem:[%s11] sm:$0xff] %v1441
  %1446 = vst [vmem:[%s11 + $0x8] sm:$0xff] %v1442
  %1447 = vst [vmem:[%s11 + $0x10] sm:$0xff] %v1443
  %1448 = vst [vmem:[%s11 + $0x18] sm:$0xff] %v1444
  // Predicated region
  $region46: #{double_conv_pallas.1} parent=0 // pred_check
    _
  $region47: #{double_conv_pallas.1} parent=0 // pred_check_branch
    %1450 = sbr.rel (0) target = $region49
  $region48: #{double_conv_pallas.1} parent=0 // pred_region
    _
  $region49: #{double_conv_pallas.1} parent=0 // pred_fallthru
    _
  // Predicated region
  $region50: #{double_conv_pallas.1} parent=0 // pred_check
    _
  $region51: #{double_conv_pallas.1} parent=0 // pred_check_branch
    %1452 = sbr.rel (0) target = $region53
  $region52: #{double_conv_pallas.1} parent=0 // pred_region
    _
  $region53: #{double_conv_pallas.1} parent=0 // pred_fallthru
    _

</llo_original>
